<compile_context>
chip_gen: v7x
topology: tpu7x:2x2x1
jax: 0.10.0
libtpu: 0.0.40
codegen_flags: <defaults>
</compile_context>

<pallas_src>
import math
from functools import partial

import jax
import jax.numpy as jnp
from jax import lax
from jax.experimental import pallas as pl
from jax.experimental.pallas import tpu as pltpu


# ----------------------------- kernel helpers -------------------------------

def _layernorm(x, gamma, beta, eps=1e-5):
    # PyTorch LayerNorm: biased variance over last dim, eps=1e-5.
    mu = jnp.mean(x, axis=-1, keepdims=True)
    var = jnp.mean((x - mu) ** 2, axis=-1, keepdims=True)
    return (x - mu) * lax.rsqrt(var + eps) * gamma + beta


def _gelu(x, approximate):
    if approximate:
        # tanh form runs on the EUP slot (frees the VALU on the widest
        # elementwise pass); deviates slightly from PyTorch exact GELU.
        c = math.sqrt(2.0 / math.pi)
        return 0.5 * x * (1.0 + jnp.tanh(c * (x + 0.044715 * x * x * x)))
    # nn.GELU() default = exact (erf-based) formulation.
    return 0.5 * x * (1.0 + lax.erf(x * (1.0 / math.sqrt(2.0))))


# ------------------------------ Pallas kernel -------------------------------

def transformer_block_kernel(num_heads, compute_dtype, gelu_approx,
                             x_ref,
                             wqkv_ref, bqkv_ref, wo_ref, bo_ref,
                             g1_ref, b1_ref,
                             w1_ref, c1_ref, w2_ref, c2_ref,
                             g2_ref, b2_ref,
                             o_ref,
                             x1_scr, acc_scr):
    Bb, S, E = x_ref.shape
    H = num_heads
    Dh = E // H
    M = Bb * S
    f32 = jnp.float32
    cd = compute_dtype
    approx_recip = jnp.dtype(cd) != jnp.dtype(f32)

    f_idx = pl.program_id(1)           # ff_dim-chunk axis ("arbitrary")
    n_f = pl.num_programs(1)

    def mm(a_f32, w_ref, b_ref=None):
        # Weights are pre-transposed to (in, out) and already stored in the
        # compute dtype host-side -> no in-kernel transpose / weight cast.
        out = jnp.dot(a_f32.astype(cd), w_ref[...], preferred_element_type=f32)
        if b_ref is not None:
            out = out + b_ref[...].astype(f32)
        return out

    # ---- phase 1 (first ff-chunk step only): QKV, attention, norm1 ---------
    @pl.when(f_idx == 0)
    def _attention_and_norm1():
        xr = x_ref[...].astype(f32).reshape(M, E)
        # Fused QKV over all Bb*S rows (fills the MXU M dim).  The 1/sqrt(Dh)
        # attention scale is pre-folded into the Q columns host-side.
        qkv = mm(xr, wqkv_ref, bqkv_ref)                     # (M, 3E) f32
        qkv_c = qkv.astype(cd)                               # ONE lane-dense cast
        q3 = qkv_c[:, :E].reshape(Bb, S, E)
        k3 = qkv_c[:, E:2 * E].reshape(Bb, S, E)
        v3 = qkv_c[:, 2 * E:].reshape(Bb, S, E)

        # Static head loop; each head batched over Bb via the proven 3-D
        # 'bqd,bkd->bqk' einsum.  Head outputs land in x1_scr lane slices (no
        # lane-dim concatenate; per-head temporaries die each iteration).
        for h in range(H):
            sl = slice(h * Dh, (h + 1) * Dh)
            s = jnp.einsum('bqd,bkd->bqk', q3[:, :, sl], k3[:, :, sl],
                           preferred_element_type=f32)       # (Bb, S, S) f32
            s = s - jnp.max(s, axis=-1, keepdims=True)
            p = jnp.exp(s)
            denom = jnp.sum(p, axis=-1, keepdims=True)       # (Bb, S, 1)
            # PV on the UNNORMALIZED probabilities, then scale the (Bb,S,Dh)
            # output: S/Dh fewer VALU multiplies than scaling p itself.
            o_h = jnp.einsum('bqk,bkd->bqd', p.astype(cd), v3[:, :, sl],
                             preferred_element_type=f32)     # (Bb, S, Dh) f32
            if approx_recip:
                inv = pl.reciprocal(denom, approx=True)      # EUP slot
            else:
                inv = 1.0 / denom
            x1_scr[:, sl] = (o_h * inv).reshape(M, Dh)

        ctx = x1_scr[...]                                    # (M, E) f32
        attn = mm(ctx, wo_ref, bo_ref)                       # out-projection
        # drop1 is identity (eval mode).
        x1 = _layernorm(xr + attn,
                        g1_ref[...].astype(f32), b1_ref[...].astype(f32))
        x1_scr[...] = x1
        acc_scr[...] = jnp.zeros_like(acc_scr)

    # ---- phase 2 (every step): one ff_dim chunk of the FFN -----------------
    x1 = x1_scr[...]
    h1 = _gelu(mm(x1, w1_ref, c1_ref), gelu_approx)          # (M, Ff) f32
    acc_scr[...] += mm(h1, w2_ref)                           # (M, E) f32 accum

    # ---- phase 3 (last ff-chunk step): bias, residual, norm2, write --------
    @pl.when(f_idx == n_f - 1)
    def _finalize():
        ffn = acc_scr[...] + c2_ref[...].astype(f32)
        # drop2 is identity (eval mode).
        out = _layernorm(x1_scr[...] + ffn,
                         g2_ref[...].astype(f32), b2_ref[...].astype(f32))
        o_ref[...] = out.reshape(Bb, S, E).astype(o_ref.dtype)


# ------------------------------ wrapper --------------------------------------

def _prepare_params(params, num_heads, compute_dtype):
    """Host-side one-time transforms: scale-fold, transpose, weight dtype."""
    wqkv, bqkv, wo, bo, g1, b1, w1, c1, w2, c2, g2, b2 = params
    E = wo.shape[0]
    Dh = E // num_heads
    scale = 1.0 / math.sqrt(Dh)
    # Fold 1/sqrt(Dh) into the Q slice of the fused in-projection.
    wqkv = wqkv.at[:E, :].multiply(scale)
    bqkv = bqkv.at[:, :E].multiply(scale)
    wd = compute_dtype
    return (wqkv.T.astype(wd), bqkv,      # (E, 3E)
            wo.T.astype(wd), bo,          # (E, E)
            g1, b1,
            w1.T.astype(wd), c1,          # (E, ff)
            w2.T.astype(wd), c2,          # (ff, E)
            g2, b2)


def _pick_block_batch(B, S, target_rows=512):
    """Pick Bb so the MXU M dim is filled, while keeping >= 2 grid steps."""
    divisors = [d for d in range(1, B + 1) if B % d == 0]
    feasible = [d for d in divisors if d * S <= max(target_rows, S)] or [1]
    # Keep at least 2 batch grid steps so v7x's second TensorCore gets work.
    multi = [d for d in feasible if B // d >= 2] or feasible
    # Prefer Bb*S a multiple of 256 (256-wide MXU on v6e/v7x), else largest.
    aligned = [d for d in multi if (d * S) % 256 == 0]
    return max(aligned or multi)


def _invariant_spec(arr, single_buffer):
    """Constant-index-map BlockSpec; optionally single-buffered (the block
    never changes, so double-buffering only costs VMEM)."""
    nd = arr.ndim
    idx = lambda gb, gf, _nd=nd: (0,) * _nd
    if single_buffer:
        try:
            return pl.BlockSpec(arr.shape, idx, pipeline_mode=pl.Buffered(1))
        except (AttributeError, TypeError):   # pipeline_mode unavailable
            pass
    return pl.BlockSpec(arr.shape, idx)


@partial(jax.jit, static_argnames=("num_heads", "compute_dtype", "block_batch",
                                   "ff_block", "gelu_approx"))
def transformer_block(x, params, *, num_heads, compute_dtype=jnp.bfloat16,
                      block_batch=None, ff_block=None, gelu_approx=False):
    B, S, E = x.shape
    ff_dim = params[6].shape[0]            # ffn[0].weight: (ff_dim, E)
    H = num_heads
    kparams = _prepare_params(params, num_heads, compute_dtype)
    (wqkv, bqkv, wo, bo, g1, b1, w1, c1, w2, c2, g2, b2) = kparams

    Bb = block_batch if block_batch is not None else _pick_block_batch(B, S)
    assert B % Bb == 0, "block batch must divide batch"
    Ff = ff_block if ff_block is not None else ff_dim
    assert ff_dim % Ff == 0, "ff_block must divide ff_dim"
    assert Ff == ff_dim or Ff % 128 == 0, "ff_block must be lane-aligned (128)"
    n_b, n_f = B // Bb, ff_dim // Ff
    grid = (n_b, n_f)
    M = Bb * S

    w_bytes = sum(int(p.size) * p.dtype.itemsize for p in kparams)
    # Single-buffer the invariant weights only when they are big enough to
    # matter for VMEM (below that, default double-buffering is harmless).
    single_buf = w_bytes >= (4 << 20)
    inv_spec = lambda a: _invariant_spec(a, single_buf)

    if n_f == 1:
        w1_spec, c1_spec, w2_spec = inv_spec(w1), inv_spec(c1), inv_spec(w2)
    else:
        w1_spec = pl.BlockSpec((E, Ff), lambda gb, gf: (0, gf))
        c1_spec = pl.BlockSpec((1, Ff), lambda gb, gf: (0, gf))
        w2_spec = pl.BlockSpec((Ff, E), lambda gb, gf: (gf, 0))

    in_specs = [
        pl.BlockSpec((Bb, S, E), lambda gb, gf: (gb, 0, 0)),      # x
        inv_spec(wqkv), inv_spec(bqkv),
        inv_spec(wo), inv_spec(bo),
        inv_spec(g1), inv_spec(b1),
        w1_spec, c1_spec, w2_spec,
        inv_spec(c2), inv_spec(g2), inv_spec(b2),
    ]
    out_spec = pl.BlockSpec((Bb, S, E), lambda gb, gf: (gb, 0, 0))

    # ---- VMEM budget (default scoped limit is only 16-32 MiB) --------------
    cd_size = jnp.dtype(compute_dtype).itemsize
    act_bytes = (
        2 * 2 * M * E * x.dtype.itemsize        # in + out blocks, dbl-buffered
        + 2 * M * E * 4                         # x1 + FFN-accumulator scratch
        + M * 3 * E * (4 + cd_size)             # qkv f32 + compute-dtype copy
        + Bb * S * S * (2 * 4 + cd_size)        # per-head scores/probs (+cast)
        + 2 * M * E * 4                         # ctx / attn / LN temporaries
        + M * Ff * (4 + cd_size)                # FFN hidden chunk
    )
    vmem_limit = int(min(max(1.5 * (act_bytes + 2 * w_bytes), 32 << 20),
                         100 << 20))

    # ---- advisory cost model ------------------------------------------------
    flops = 2 * B * S * (3 * E * E + 2 * S * E + E * E + 2 * E * ff_dim)
    transcendentals = B * H * S * (S + 1) + B * S * ff_dim + 2 * B * S
    ffn_w_bytes = sum(int(p.size) * p.dtype.itemsize for p in (w1, c1, w2))
    # Invariant-index-map weights are fetched once; tiled FFN weights stream
    # once per batch grid step; activations once in, once out.
    bytes_accessed = (2 * B * S * E * x.dtype.itemsize
                      + (w_bytes - ffn_w_bytes)
                      + (n_b if n_f > 1 else 1) * ffn_w_bytes)

    return pl.pallas_call(
        partial(transformer_block_kernel, num_heads, compute_dtype, gelu_approx),
        out_shape=jax.ShapeDtypeStruct((B, S, E), x.dtype),
        grid_spec=pltpu.PrefetchScalarGridSpec(
            num_scalar_prefetch=0,
            grid=grid,
            in_specs=in_specs,
            out_specs=out_spec,
            scratch_shapes=[pltpu.VMEM((M, E), jnp.float32),   # ctx -> x1
                            pltpu.VMEM((M, E), jnp.float32)],  # FFN accumulator
        ),
        compiler_params=pltpu.CompilerParams(
            dimension_semantics=("parallel", "arbitrary"),
            vmem_limit_bytes=vmem_limit,
        ),
        cost_estimate=pl.CostEstimate(
            flops=int(flops),
            transcendentals=int(transcendentals),
            bytes_accessed=int(bytes_accessed),
        ),
    )(x, *kparams)


# ------------------------------ reference (pure JAX) -------------------------

def transformer_block_ref(x, params, num_heads):
    wqkv, bqkv, wo, bo, g1, b1, w1, c1, w2, c2, g2, b2 = params
    B, S, E = x.shape
    Dh = E // num_heads
    scale = 1.0 / math.sqrt(Dh)

    qkv = x @ wqkv.T + bqkv[0]
    q, k, v = qkv[..., :E], qkv[..., E:2 * E], qkv[..., 2 * E:]

    def split(t):  # (B, S, E) -> (B, H, S, Dh)
        return t.reshape(B, S, num_heads, Dh).transpose(0, 2, 1, 3)

    qh, kh, vh = split(q) * scale, split(k), split(v)
    s = jnp.einsum('bhqd,bhkd->bhqk', qh, kh)
    p = jax.nn.softmax(s, axis=-1)
    attn = jnp.einsum('bhqk,bhkd->bhqd', p, vh).transpose(0, 2, 1, 3).reshape(B, S, E)
    attn = attn @ wo.T + bo[0]

    def ln(t, g, b):
        mu = jnp.mean(t, axis=-1, keepdims=True)
        var = jnp.mean((t - mu) ** 2, axis=-1, keepdims=True)
        return (t - mu) * lax.rsqrt(var + 1e-5) * g[0] + b[0]

    x1 = ln(x + attn, g1, b1)
    h1 = x1 @ w1.T + c1[0]
    h1 = 0.5 * h1 * (1.0 + lax.erf(h1 / math.sqrt(2.0)))
    ffn = h1 @ w2.T + c2[0]
    return ln(x1 + ffn, g2, b2)


# ------------------------------ main -----------------------------------------

def make_params(key, E, ff_dim):
    ks = jax.random.split(key, 12)

    def rnd(k, shape, scale=0.05):
        return (scale * jax.random.normal(k, shape)).astype(jnp.float32)

    # nn.MultiheadAttention / nn.Linear / nn.LayerNorm conventions; 1-D params
    # stored as (1, N).
    wqkv = rnd(ks[0], (3 * E, E))          # in_proj_weight
    bqkv = rnd(ks[1], (1, 3 * E))          # in_proj_bias
    wo   = rnd(ks[2], (E, E))              # out_proj.weight
    bo   = rnd(ks[3], (1, E))              # out_proj.bias
    g1   = jnp.ones((1, E), jnp.float32) + rnd(ks[4], (1, E))    # norm1.weight
    b1   = rnd(ks[5], (1, E))                                    # norm1.bias
    w1   = rnd(ks[6], (ff_dim, E))         # ffn[0].weight
    c1   = rnd(ks[7], (1, ff_dim))         # ffn[0].bias
    w2   = rnd(ks[8], (E, ff_dim))         # ffn[3].weight
    c2   = rnd(ks[9], (1, E))              # ffn[3].bias
    g2   = jnp.ones((1, E), jnp.float32) + rnd(ks[10], (1, E))   # norm2.weight
    b2   = rnd(ks[11], (1, E))                                   # norm2.bias
    return (wqkv, bqkv, wo, bo, g1, b1, w1, c1, w2, c2, g2, b2)


if __name__ == "__main__":
    B, S, E, H = 2, 8, 32, 4
    key = jax.random.PRNGKey(0)
    kp1, kp2, kx = jax.random.split(key, 3)
    x = jax.random.normal(kx, (B, S, E), dtype=jnp.float32)

    # --- config 1: small ff_dim, single FFN chunk ----------------------------
    params = make_params(kp1, E, ff_dim=64)
    ref = transformer_block_ref(x, params, H)

    out_f32 = jax.block_until_ready(
        transformer_block(x, params, num_heads=H, compute_dtype=jnp.float32))
    assert out_f32.shape == (B, S, E)
    assert jnp.allclose(out_f32, ref, atol=2e-4, rtol=2e-4), \
        "f32 kernel mismatch vs JAX reference"

    out_bf16 = jax.block_until_ready(
        transformer_block(x, params, num_heads=H, compute_dtype=jnp.bfloat16))
    assert jnp.allclose(out_bf16, ref, atol=2e-2, rtol=2e-2), \
        "bf16 kernel mismatch vs JAX reference"

    out_tanh = jax.block_until_ready(
        transformer_block(x, params, num_heads=H, compute_dtype=jnp.bfloat16,
                          gelu_approx=True))
    assert jnp.allclose(out_tanh, ref, atol=5e-2, rtol=5e-2), \
        "approx-GELU kernel mismatch vs JAX reference"

    # --- config 2: exercises the ff_dim grid axis (2 lane-aligned chunks) ----
    params2 = make_params(kp2, E, ff_dim=256)
    ref2 = transformer_block_ref(x, params2, H)
    out2 = jax.block_until_ready(
        transformer_block(x, params2, num_heads=H, compute_dtype=jnp.float32,
                          ff_block=128))
    assert jnp.allclose(out2, ref2, atol=2e-4, rtol=2e-4), \
        "ff-tiled kernel mismatch vs JAX reference"

    print("KERNEL_OK")
</pallas_src>

<mosaic_0001>
module attributes {stable_mosaic.version = 11 : i64} {
  func.func @transformer_block_kernel(%arg0: i32, %arg1: i32, %arg2: memref<1x8x32xf32, #tpu.memory_space<vmem>>, %arg3: memref<32x96xf32, #tpu.memory_space<vmem>>, %arg4: memref<1x96xf32, #tpu.memory_space<vmem>>, %arg5: memref<32x32xf32, #tpu.memory_space<vmem>>, %arg6: memref<1x32xf32, #tpu.memory_space<vmem>>, %arg7: memref<1x32xf32, #tpu.memory_space<vmem>>, %arg8: memref<1x32xf32, #tpu.memory_space<vmem>>, %arg9: memref<32x64xf32, #tpu.memory_space<vmem>>, %arg10: memref<1x64xf32, #tpu.memory_space<vmem>>, %arg11: memref<64x32xf32, #tpu.memory_space<vmem>>, %arg12: memref<1x32xf32, #tpu.memory_space<vmem>>, %arg13: memref<1x32xf32, #tpu.memory_space<vmem>>, %arg14: memref<1x32xf32, #tpu.memory_space<vmem>>, %arg15: memref<1x8x32xf32, #tpu.memory_space<vmem>>, %arg16: memref<8x32xf32, #tpu.memory_space<vmem>>, %arg17: memref<8x32xf32, #tpu.memory_space<vmem>>) attributes {dimension_semantics = [#tpu.dimension_semantics<parallel>, #tpu.dimension_semantics<arbitrary>], iteration_bounds = array<i64: 2, 1>, scalar_prefetch = 0 : i64, scratch_operands = 2 : i64, tpu.core_type = #tpu.core_type<tc>, window_params = [{transform_indices = @transform_0, window_bounds = array<i64: 1, 8, 32>}, {pipeline_mode = #tpu.pipeline_mode<synchronous>, transform_indices = @transform_1, window_bounds = array<i64: 32, 96>}, {pipeline_mode = #tpu.pipeline_mode<synchronous>, transform_indices = @transform_2, window_bounds = array<i64: 1, 96>}, {pipeline_mode = #tpu.pipeline_mode<synchronous>, transform_indices = @transform_3, window_bounds = array<i64: 32, 32>}, {pipeline_mode = #tpu.pipeline_mode<synchronous>, transform_indices = @transform_4, window_bounds = array<i64: 1, 32>}, {pipeline_mode = #tpu.pipeline_mode<synchronous>, transform_indices = @transform_5, window_bounds = array<i64: 1, 32>}, {pipeline_mode = #tpu.pipeline_mode<synchronous>, transform_indices = @transform_6, window_bounds = array<i64: 1, 32>}, {pipeline_mode = #tpu.pipeline_mode<synchronous>, transform_indices = @transform_7, window_bounds = array<i64: 32, 64>}, {pipeline_mode = #tpu.pipeline_mode<synchronous>, transform_indices = @transform_8, window_bounds = array<i64: 1, 64>}, {pipeline_mode = #tpu.pipeline_mode<synchronous>, transform_indices = @transform_9, window_bounds = array<i64: 64, 32>}, {pipeline_mode = #tpu.pipeline_mode<synchronous>, transform_indices = @transform_10, window_bounds = array<i64: 1, 32>}, {pipeline_mode = #tpu.pipeline_mode<synchronous>, transform_indices = @transform_11, window_bounds = array<i64: 1, 32>}, {pipeline_mode = #tpu.pipeline_mode<synchronous>, transform_indices = @transform_12, window_bounds = array<i64: 1, 32>}, {transform_indices = @transform_13, window_bounds = array<i64: 1, 8, 32>}]} {
    %c0_i32 = arith.constant 0 : i32
    %0 = arith.cmpi eq, %arg1, %c0_i32 : i32
    %1 = arith.extui %0 : i1 to i32
    %c0_i32_0 = arith.constant 0 : i32
    %2 = arith.cmpi ne, %1, %c0_i32_0 : i32
    scf.if %2 {
      %c0_18 = arith.constant 0 : index
      %c0_19 = arith.constant 0 : index
      %c0_20 = arith.constant 0 : index
      %25 = vector.load %arg2[%c0_18, %c0_19, %c0_20] : memref<1x8x32xf32, #tpu.memory_space<vmem>>, vector<1x8x32xf32>
      %26 = vector.shape_cast %25 : vector<1x8x32xf32> to vector<8x32xf32>
      %c0_21 = arith.constant 0 : index
      %c0_22 = arith.constant 0 : index
      %27 = vector.load %arg3[%c0_21, %c0_22] : memref<32x96xf32, #tpu.memory_space<vmem>>, vector<32x96xf32>
      %cst_23 = arith.constant dense<0.000000e+00> : vector<8x96xf32>
      %28 = tpu.matmul %26, %27, %cst_23 {dimension_numbers = #tpu.dot_dimension_numbers<[1], [0], [0], [1], [0, 0, 1, 1], [], []>} : vector<8x32xf32>, vector<32x96xf32>, vector<8x96xf32> -> vector<8x96xf32>
      %c0_24 = arith.constant 0 : index
      %c0_25 = arith.constant 0 : index
      %29 = vector.load %arg4[%c0_24, %c0_25] : memref<1x96xf32, #tpu.memory_space<vmem>>, vector<1x96xf32>
      %30 = vector.broadcast %29 : vector<1x96xf32> to vector<8x96xf32>
      %31 = arith.addf %28, %30 : vector<8x96xf32>
      %32 = vector.extract_strided_slice %31 {offsets = [0, 0], sizes = [8, 32], strides = [1, 1]} : vector<8x96xf32> to vector<8x32xf32>
      %33 = vector.shape_cast %32 : vector<8x32xf32> to vector<1x8x32xf32>
      %34 = vector.extract_strided_slice %31 {offsets = [0, 32], sizes = [8, 32], strides = [1, 1]} : vector<8x96xf32> to vector<8x32xf32>
      %35 = vector.shape_cast %34 : vector<8x32xf32> to vector<1x8x32xf32>
      %36 = vector.extract_strided_slice %31 {offsets = [0, 64], sizes = [8, 32], strides = [1, 1]} : vector<8x96xf32> to vector<8x32xf32>
      %37 = vector.shape_cast %36 : vector<8x32xf32> to vector<1x8x32xf32>
      %38 = vector.extract_strided_slice %33 {offsets = [0, 0, 0], sizes = [1, 8, 8], strides = [1, 1, 1]} : vector<1x8x32xf32> to vector<1x8x8xf32>
      %39 = vector.extract_strided_slice %35 {offsets = [0, 0, 0], sizes = [1, 8, 8], strides = [1, 1, 1]} : vector<1x8x32xf32> to vector<1x8x8xf32>
      "tpu.trace_start"() <{level = 10 : i32, message = "bqd,bkd->bqk"}> : () -> ()
      %cst_26 = arith.constant dense<0.000000e+00> : vector<1x8x8xf32>
      %40 = tpu.matmul %38, %39, %cst_26 {dimension_numbers = #tpu.dot_dimension_numbers<[2], [2], [1], [1], [0, 0, 0, 1, 1, 1], [0], [0]>} : vector<1x8x8xf32>, vector<1x8x8xf32>, vector<1x8x8xf32> -> vector<1x8x8xf32>
      "tpu.trace_stop"() : () -> ()
      %cst_27 = arith.constant dense<0xFF800000> : vector<1x8xf32>
      %41 = vector.multi_reduction <maximumf>, %40, %cst_27 [2] : vector<1x8x8xf32> to vector<1x8xf32>
      %42 = vector.shape_cast %41 : vector<1x8xf32> to vector<1x8x1xf32>
      %43 = vector.broadcast %42 : vector<1x8x1xf32> to vector<1x8x8xf32>
      %44 = arith.subf %40, %43 : vector<1x8x8xf32>
      %45 = math.exp %44 : vector<1x8x8xf32>
      %cst_28 = arith.constant dense<0.000000e+00> : vector<1x8xf32>
      %46 = vector.multi_reduction <add>, %45, %cst_28 [2] : vector<1x8x8xf32> to vector<1x8xf32>
      %47 = vector.shape_cast %46 : vector<1x8xf32> to vector<1x8x1xf32>
      %48 = vector.extract_strided_slice %37 {offsets = [0, 0, 0], sizes = [1, 8, 8], strides = [1, 1, 1]} : vector<1x8x32xf32> to vector<1x8x8xf32>
      "tpu.trace_start"() <{level = 10 : i32, message = "bqk,bkd->bqd"}> : () -> ()
      %cst_29 = arith.constant dense<0.000000e+00> : vector<1x8x8xf32>
      %49 = tpu.matmul %45, %48, %cst_29 {dimension_numbers = #tpu.dot_dimension_numbers<[2], [1], [1], [2], [0, 0, 0, 1, 1, 2], [0], [0]>} : vector<1x8x8xf32>, vector<1x8x8xf32>, vector<1x8x8xf32> -> vector<1x8x8xf32>
      "tpu.trace_stop"() : () -> ()
      %cst_30 = arith.constant 1.000000e+00 : f32
      %50 = vector.broadcast %cst_30 : f32 to vector<1x8x1xf32>
      %51 = arith.divf %50, %47 : vector<1x8x1xf32>
      %52 = vector.broadcast %51 : vector<1x8x1xf32> to vector<1x8x8xf32>
      %53 = arith.mulf %49, %52 : vector<1x8x8xf32>
      %54 = vector.shape_cast %53 : vector<1x8x8xf32> to vector<8x8xf32>
      %c0_31 = arith.constant 0 : index
      %c0_32 = arith.constant 0 : index
      %55 = vector.load %arg16[%c0_31, %c0_32] : memref<8x32xf32, #tpu.memory_space<vmem>>, vector<8x8xf32>
      tpu.vector_store %arg16[%c0_31, %c0_32], %54 {strides = array<i32>} : memref<8x32xf32, #tpu.memory_space<vmem>>, vector<8x8xf32>,
      %56 = vector.extract_strided_slice %33 {offsets = [0, 0, 8], sizes = [1, 8, 8], strides = [1, 1, 1]} : vector<1x8x32xf32> to vector<1x8x8xf32>
      %57 = vector.extract_strided_slice %35 {offsets = [0, 0, 8], sizes = [1, 8, 8], strides = [1, 1, 1]} : vector<1x8x32xf32> to vector<1x8x8xf32>
      "tpu.trace_start"() <{level = 10 : i32, message = "bqd,bkd->bqk"}> : () -> ()
      %cst_33 = arith.constant dense<0.000000e+00> : vector<1x8x8xf32>
      %58 = tpu.matmul %56, %57, %cst_33 {dimension_numbers = #tpu.dot_dimension_numbers<[2], [2], [1], [1], [0, 0, 0, 1, 1, 1], [0], [0]>} : vector<1x8x8xf32>, vector<1x8x8xf32>, vector<1x8x8xf32> -> vector<1x8x8xf32>
      "tpu.trace_stop"() : () -> ()
      %cst_34 = arith.constant dense<0xFF800000> : vector<1x8xf32>
      %59 = vector.multi_reduction <maximumf>, %58, %cst_34 [2] : vector<1x8x8xf32> to vector<1x8xf32>
      %60 = vector.shape_cast %59 : vector<1x8xf32> to vector<1x8x1xf32>
      %61 = vector.broadcast %60 : vector<1x8x1xf32> to vector<1x8x8xf32>
      %62 = arith.subf %58, %61 : vector<1x8x8xf32>
      %63 = math.exp %62 : vector<1x8x8xf32>
      %cst_35 = arith.constant dense<0.000000e+00> : vector<1x8xf32>
      %64 = vector.multi_reduction <add>, %63, %cst_35 [2] : vector<1x8x8xf32> to vector<1x8xf32>
      %65 = vector.shape_cast %64 : vector<1x8xf32> to vector<1x8x1xf32>
      %66 = vector.extract_strided_slice %37 {offsets = [0, 0, 8], sizes = [1, 8, 8], strides = [1, 1, 1]} : vector<1x8x32xf32> to vector<1x8x8xf32>
      "tpu.trace_start"() <{level = 10 : i32, message = "bqk,bkd->bqd"}> : () -> ()
      %cst_36 = arith.constant dense<0.000000e+00> : vector<1x8x8xf32>
      %67 = tpu.matmul %63, %66, %cst_36 {dimension_numbers = #tpu.dot_dimension_numbers<[2], [1], [1], [2], [0, 0, 0, 1, 1, 2], [0], [0]>} : vector<1x8x8xf32>, vector<1x8x8xf32>, vector<1x8x8xf32> -> vector<1x8x8xf32>
      "tpu.trace_stop"() : () -> ()
      %cst_37 = arith.constant 1.000000e+00 : f32
      %68 = vector.broadcast %cst_37 : f32 to vector<1x8x1xf32>
      %69 = arith.divf %68, %65 : vector<1x8x1xf32>
      %70 = vector.broadcast %69 : vector<1x8x1xf32> to vector<1x8x8xf32>
      %71 = arith.mulf %67, %70 : vector<1x8x8xf32>
      %72 = vector.shape_cast %71 : vector<1x8x8xf32> to vector<8x8xf32>
      %c0_38 = arith.constant 0 : index
      %c8 = arith.constant 8 : index
      %73 = vector.load %arg16[%c0_38, %c8] : memref<8x32xf32, #tpu.memory_space<vmem>>, vector<8x8xf32>
      tpu.vector_store %arg16[%c0_38, %c8], %72 {strides = array<i32>} : memref<8x32xf32, #tpu.memory_space<vmem>>, vector<8x8xf32>,
      %74 = vector.extract_strided_slice %33 {offsets = [0, 0, 16], sizes = [1, 8, 8], strides = [1, 1, 1]} : vector<1x8x32xf32> to vector<1x8x8xf32>
      %75 = vector.extract_strided_slice %35 {offsets = [0, 0, 16], sizes = [1, 8, 8], strides = [1, 1, 1]} : vector<1x8x32xf32> to vector<1x8x8xf32>
      "tpu.trace_start"() <{level = 10 : i32, message = "bqd,bkd->bqk"}> : () -> ()
      %cst_39 = arith.constant dense<0.000000e+00> : vector<1x8x8xf32>
      %76 = tpu.matmul %74, %75, %cst_39 {dimension_numbers = #tpu.dot_dimension_numbers<[2], [2], [1], [1], [0, 0, 0, 1, 1, 1], [0], [0]>} : vector<1x8x8xf32>, vector<1x8x8xf32>, vector<1x8x8xf32> -> vector<1x8x8xf32>
      "tpu.trace_stop"() : () -> ()
      %cst_40 = arith.constant dense<0xFF800000> : vector<1x8xf32>
      %77 = vector.multi_reduction <maximumf>, %76, %cst_40 [2] : vector<1x8x8xf32> to vector<1x8xf32>
      %78 = vector.shape_cast %77 : vector<1x8xf32> to vector<1x8x1xf32>
      %79 = vector.broadcast %78 : vector<1x8x1xf32> to vector<1x8x8xf32>
      %80 = arith.subf %76, %79 : vector<1x8x8xf32>
      %81 = math.exp %80 : vector<1x8x8xf32>
      %cst_41 = arith.constant dense<0.000000e+00> : vector<1x8xf32>
      %82 = vector.multi_reduction <add>, %81, %cst_41 [2] : vector<1x8x8xf32> to vector<1x8xf32>
      %83 = vector.shape_cast %82 : vector<1x8xf32> to vector<1x8x1xf32>
      %84 = vector.extract_strided_slice %37 {offsets = [0, 0, 16], sizes = [1, 8, 8], strides = [1, 1, 1]} : vector<1x8x32xf32> to vector<1x8x8xf32>
      "tpu.trace_start"() <{level = 10 : i32, message = "bqk,bkd->bqd"}> : () -> ()
      %cst_42 = arith.constant dense<0.000000e+00> : vector<1x8x8xf32>
      %85 = tpu.matmul %81, %84, %cst_42 {dimension_numbers = #tpu.dot_dimension_numbers<[2], [1], [1], [2], [0, 0, 0, 1, 1, 2], [0], [0]>} : vector<1x8x8xf32>, vector<1x8x8xf32>, vector<1x8x8xf32> -> vector<1x8x8xf32>
      "tpu.trace_stop"() : () -> ()
      %cst_43 = arith.constant 1.000000e+00 : f32
      %86 = vector.broadcast %cst_43 : f32 to vector<1x8x1xf32>
      %87 = arith.divf %86, %83 : vector<1x8x1xf32>
      %88 = vector.broadcast %87 : vector<1x8x1xf32> to vector<1x8x8xf32>
      %89 = arith.mulf %85, %88 : vector<1x8x8xf32>
      %90 = vector.shape_cast %89 : vector<1x8x8xf32> to vector<8x8xf32>
      %c0_44 = arith.constant 0 : index
      %c16 = arith.constant 16 : index
      %91 = vector.load %arg16[%c0_44, %c16] : memref<8x32xf32, #tpu.memory_space<vmem>>, vector<8x8xf32>
      tpu.vector_store %arg16[%c0_44, %c16], %90 {strides = array<i32>} : memref<8x32xf32, #tpu.memory_space<vmem>>, vector<8x8xf32>,
      %92 = vector.extract_strided_slice %33 {offsets = [0, 0, 24], sizes = [1, 8, 8], strides = [1, 1, 1]} : vector<1x8x32xf32> to vector<1x8x8xf32>
      %93 = vector.extract_strided_slice %35 {offsets = [0, 0, 24], sizes = [1, 8, 8], strides = [1, 1, 1]} : vector<1x8x32xf32> to vector<1x8x8xf32>
      "tpu.trace_start"() <{level = 10 : i32, message = "bqd,bkd->bqk"}> : () -> ()
      %cst_45 = arith.constant dense<0.000000e+00> : vector<1x8x8xf32>
      %94 = tpu.matmul %92, %93, %cst_45 {dimension_numbers = #tpu.dot_dimension_numbers<[2], [2], [1], [1], [0, 0, 0, 1, 1, 1], [0], [0]>} : vector<1x8x8xf32>, vector<1x8x8xf32>, vector<1x8x8xf32> -> vector<1x8x8xf32>
      "tpu.trace_stop"() : () -> ()
      %cst_46 = arith.constant dense<0xFF800000> : vector<1x8xf32>
      %95 = vector.multi_reduction <maximumf>, %94, %cst_46 [2] : vector<1x8x8xf32> to vector<1x8xf32>
      %96 = vector.shape_cast %95 : vector<1x8xf32> to vector<1x8x1xf32>
      %97 = vector.broadcast %96 : vector<1x8x1xf32> to vector<1x8x8xf32>
      %98 = arith.subf %94, %97 : vector<1x8x8xf32>
      %99 = math.exp %98 : vector<1x8x8xf32>
      %cst_47 = arith.constant dense<0.000000e+00> : vector<1x8xf32>
      %100 = vector.multi_reduction <add>, %99, %cst_47 [2] : vector<1x8x8xf32> to vector<1x8xf32>
      %101 = vector.shape_cast %100 : vector<1x8xf32> to vector<1x8x1xf32>
      %102 = vector.extract_strided_slice %37 {offsets = [0, 0, 24], sizes = [1, 8, 8], strides = [1, 1, 1]} : vector<1x8x32xf32> to vector<1x8x8xf32>
      "tpu.trace_start"() <{level = 10 : i32, message = "bqk,bkd->bqd"}> : () -> ()
      %cst_48 = arith.constant dense<0.000000e+00> : vector<1x8x8xf32>
      %103 = tpu.matmul %99, %102, %cst_48 {dimension_numbers = #tpu.dot_dimension_numbers<[2], [1], [1], [2], [0, 0, 0, 1, 1, 2], [0], [0]>} : vector<1x8x8xf32>, vector<1x8x8xf32>, vector<1x8x8xf32> -> vector<1x8x8xf32>
      "tpu.trace_stop"() : () -> ()
      %cst_49 = arith.constant 1.000000e+00 : f32
      %104 = vector.broadcast %cst_49 : f32 to vector<1x8x1xf32>
      %105 = arith.divf %104, %101 : vector<1x8x1xf32>
      %106 = vector.broadcast %105 : vector<1x8x1xf32> to vector<1x8x8xf32>
      %107 = arith.mulf %103, %106 : vector<1x8x8xf32>
      %108 = vector.shape_cast %107 : vector<1x8x8xf32> to vector<8x8xf32>
      %c0_50 = arith.constant 0 : index
      %c24 = arith.constant 24 : index
      %109 = vector.load %arg16[%c0_50, %c24] : memref<8x32xf32, #tpu.memory_space<vmem>>, vector<8x8xf32>
      tpu.vector_store %arg16[%c0_50, %c24], %108 {strides = array<i32>} : memref<8x32xf32, #tpu.memory_space<vmem>>, vector<8x8xf32>,
      %c0_51 = arith.constant 0 : index
      %c0_52 = arith.constant 0 : index
      %110 = vector.load %arg16[%c0_51, %c0_52] : memref<8x32xf32, #tpu.memory_space<vmem>>, vector<8x32xf32>
      %c0_53 = arith.constant 0 : index
      %c0_54 = arith.constant 0 : index
      %111 = vector.load %arg5[%c0_53, %c0_54] : memref<32x32xf32, #tpu.memory_space<vmem>>, vector<32x32xf32>
      %cst_55 = arith.constant dense<0.000000e+00> : vector<8x32xf32>
      %112 = tpu.matmul %110, %111, %cst_55 {dimension_numbers = #tpu.dot_dimension_numbers<[1], [0], [0], [1], [0, 0, 1, 1], [], []>} : vector<8x32xf32>, vector<32x32xf32>, vector<8x32xf32> -> vector<8x32xf32>
      %c0_56 = arith.constant 0 : index
      %c0_57 = arith.constant 0 : index
      %113 = vector.load %arg6[%c0_56, %c0_57] : memref<1x32xf32, #tpu.memory_space<vmem>>, vector<1x32xf32>
      %114 = vector.broadcast %113 : vector<1x32xf32> to vector<8x32xf32>
      %115 = arith.addf %112, %114 : vector<8x32xf32>
      %116 = arith.addf %26, %115 : vector<8x32xf32>
      %c0_58 = arith.constant 0 : index
      %c0_59 = arith.constant 0 : index
      %117 = vector.load %arg7[%c0_58, %c0_59] : memref<1x32xf32, #tpu.memory_space<vmem>>, vector<1x32xf32>
      %c0_60 = arith.constant 0 : index
      %c0_61 = arith.constant 0 : index
      %118 = vector.load %arg8[%c0_60, %c0_61] : memref<1x32xf32, #tpu.memory_space<vmem>>, vector<1x32xf32>
      %cst_62 = arith.constant dense<0.000000e+00> : vector<8xf32>
      %119 = vector.multi_reduction <add>, %116, %cst_62 [1] : vector<8x32xf32> to vector<8xf32>
      %120 = vector.shape_cast %119 : vector<8xf32> to vector<8x1xf32>
      %cst_63 = arith.constant 3.200000e+01 : f32
      %121 = vector.broadcast %cst_63 : f32 to vector<8x1xf32>
      %122 = arith.divf %120, %121 : vector<8x1xf32>
      %123 = vector.broadcast %122 : vector<8x1xf32> to vector<8x32xf32>
      %124 = arith.subf %116, %123 : vector<8x32xf32>
      %125 = arith.mulf %124, %124 : vector<8x32xf32>
      %cst_64 = arith.constant dense<0.000000e+00> : vector<8xf32>
      %126 = vector.multi_reduction <add>, %125, %cst_64 [1] : vector<8x32xf32> to vector<8xf32>
      %127 = vector.shape_cast %126 : vector<8xf32> to vector<8x1xf32>
      %cst_65 = arith.constant 3.200000e+01 : f32
      %128 = vector.broadcast %cst_65 : f32 to vector<8x1xf32>
      %129 = arith.divf %127, %128 : vector<8x1xf32>
      %130 = vector.broadcast %122 : vector<8x1xf32> to vector<8x32xf32>
      %131 = arith.subf %116, %130 : vector<8x32xf32>
      %cst_66 = arith.constant 9.99999974E-6 : f32
      %132 = vector.broadcast %cst_66 : f32 to vector<8x1xf32>
      %133 = arith.addf %129, %132 : vector<8x1xf32>
      %134 = math.rsqrt %133 : vector<8x1xf32>
      %135 = vector.broadcast %134 : vector<8x1xf32> to vector<8x32xf32>
      %136 = arith.mulf %131, %135 : vector<8x32xf32>
      %137 = vector.broadcast %117 : vector<1x32xf32> to vector<8x32xf32>
      %138 = arith.mulf %136, %137 : vector<8x32xf32>
      %139 = vector.broadcast %118 : vector<1x32xf32> to vector<8x32xf32>
      %140 = arith.addf %138, %139 : vector<8x32xf32>
      %c0_67 = arith.constant 0 : index
      %c0_68 = arith.constant 0 : index
      %141 = vector.load %arg16[%c0_67, %c0_68] : memref<8x32xf32, #tpu.memory_space<vmem>>, vector<8x32xf32>
      tpu.vector_store %arg16[%c0_67, %c0_68], %140 {strides = array<i32>} : memref<8x32xf32, #tpu.memory_space<vmem>>, vector<8x32xf32>,
      %cst_69 = arith.constant 0.000000e+00 : f32
      %142 = vector.broadcast %cst_69 : f32 to vector<8x32xf32>
      %c0_70 = arith.constant 0 : index
      %c0_71 = arith.constant 0 : index
      %143 = vector.load %arg17[%c0_70, %c0_71] : memref<8x32xf32, #tpu.memory_space<vmem>>, vector<8x32xf32>
      tpu.vector_store %arg17[%c0_70, %c0_71], %142 {strides = array<i32>} : memref<8x32xf32, #tpu.memory_space<vmem>>, vector<8x32xf32>,
    } else {
    }
    %c0 = arith.constant 0 : index
    %c0_1 = arith.constant 0 : index
    %3 = vector.load %arg16[%c0, %c0_1] : memref<8x32xf32, #tpu.memory_space<vmem>>, vector<8x32xf32>
    %c0_2 = arith.constant 0 : index
    %c0_3 = arith.constant 0 : index
    %4 = vector.load %arg9[%c0_2, %c0_3] : memref<32x64xf32, #tpu.memory_space<vmem>>, vector<32x64xf32>
    %cst = arith.constant dense<0.000000e+00> : vector<8x64xf32>
    %5 = tpu.matmul %3, %4, %cst {dimension_numbers = #tpu.dot_dimension_numbers<[1], [0], [0], [1], [0, 0, 1, 1], [], []>} : vector<8x32xf32>, vector<32x64xf32>, vector<8x64xf32> -> vector<8x64xf32>
    %c0_4 = arith.constant 0 : index
    %c0_5 = arith.constant 0 : index
    %6 = vector.load %arg10[%c0_4, %c0_5] : memref<1x64xf32, #tpu.memory_space<vmem>>, vector<1x64xf32>
    %7 = vector.broadcast %6 : vector<1x64xf32> to vector<8x64xf32>
    %8 = arith.addf %5, %7 : vector<8x64xf32>
    %cst_6 = arith.constant 5.000000e-01 : f32
    %9 = vector.broadcast %cst_6 : f32 to vector<8x64xf32>
    %10 = arith.mulf %9, %8 : vector<8x64xf32>
    %cst_7 = arith.constant 0.707106769 : f32
    %11 = vector.broadcast %cst_7 : f32 to vector<8x64xf32>
    %12 = arith.mulf %8, %11 : vector<8x64xf32>
    %13 = math.erf %12 : vector<8x64xf32>
    %cst_8 = arith.constant 1.000000e+00 : f32
    %14 = vector.broadcast %cst_8 : f32 to vector<8x64xf32>
    %15 = arith.addf %14, %13 : vector<8x64xf32>
    %16 = arith.mulf %10, %15 : vector<8x64xf32>
    %c0_9 = arith.constant 0 : index
    %c0_10 = arith.constant 0 : index
    %17 = vector.load %arg17[%c0_9, %c0_10] : memref<8x32xf32, #tpu.memory_space<vmem>>, vector<8x32xf32>
    %c0_11 = arith.constant 0 : index
    %c0_12 = arith.constant 0 : index
    %18 = vector.load %arg11[%c0_11, %c0_12] : memref<64x32xf32, #tpu.memory_space<vmem>>, vector<64x32xf32>
    %cst_13 = arith.constant dense<0.000000e+00> : vector<8x32xf32>
    %19 = tpu.matmul %16, %18, %cst_13 {dimension_numbers = #tpu.dot_dimension_numbers<[1], [0], [0], [1], [0, 0, 1, 1], [], []>} : vector<8x64xf32>, vector<64x32xf32>, vector<8x32xf32> -> vector<8x32xf32>
    %20 = arith.addf %17, %19 : vector<8x32xf32>
    %c0_14 = arith.constant 0 : index
    %c0_15 = arith.constant 0 : index
    %21 = vector.load %arg17[%c0_14, %c0_15] : memref<8x32xf32, #tpu.memory_space<vmem>>, vector<8x32xf32>
    tpu.vector_store %arg17[%c0_14, %c0_15], %20 {strides = array<i32>} : memref<8x32xf32, #tpu.memory_space<vmem>>, vector<8x32xf32>,
    %c0_i32_16 = arith.constant 0 : i32
    %22 = arith.cmpi eq, %arg1, %c0_i32_16 : i32
    %23 = arith.extui %22 : i1 to i32
    %c0_i32_17 = arith.constant 0 : i32
    %24 = arith.cmpi ne, %23, %c0_i32_17 : i32
    scf.if %24 {
      %c0_18 = arith.constant 0 : index
      %c0_19 = arith.constant 0 : index
      %25 = vector.load %arg17[%c0_18, %c0_19] : memref<8x32xf32, #tpu.memory_space<vmem>>, vector<8x32xf32>
      %c0_20 = arith.constant 0 : index
      %c0_21 = arith.constant 0 : index
      %26 = vector.load %arg12[%c0_20, %c0_21] : memref<1x32xf32, #tpu.memory_space<vmem>>, vector<1x32xf32>
      %27 = vector.broadcast %26 : vector<1x32xf32> to vector<8x32xf32>
      %28 = arith.addf %25, %27 : vector<8x32xf32>
      %c0_22 = arith.constant 0 : index
      %c0_23 = arith.constant 0 : index
      %29 = vector.load %arg16[%c0_22, %c0_23] : memref<8x32xf32, #tpu.memory_space<vmem>>, vector<8x32xf32>
      %30 = arith.addf %29, %28 : vector<8x32xf32>
      %c0_24 = arith.constant 0 : index
      %c0_25 = arith.constant 0 : index
      %31 = vector.load %arg13[%c0_24, %c0_25] : memref<1x32xf32, #tpu.memory_space<vmem>>, vector<1x32xf32>
      %c0_26 = arith.constant 0 : index
      %c0_27 = arith.constant 0 : index
      %32 = vector.load %arg14[%c0_26, %c0_27] : memref<1x32xf32, #tpu.memory_space<vmem>>, vector<1x32xf32>
      %cst_28 = arith.constant dense<0.000000e+00> : vector<8xf32>
      %33 = vector.multi_reduction <add>, %30, %cst_28 [1] : vector<8x32xf32> to vector<8xf32>
      %34 = vector.shape_cast %33 : vector<8xf32> to vector<8x1xf32>
      %cst_29 = arith.constant 3.200000e+01 : f32
      %35 = vector.broadcast %cst_29 : f32 to vector<8x1xf32>
      %36 = arith.divf %34, %35 : vector<8x1xf32>
      %37 = vector.broadcast %36 : vector<8x1xf32> to vector<8x32xf32>
      %38 = arith.subf %30, %37 : vector<8x32xf32>
      %39 = arith.mulf %38, %38 : vector<8x32xf32>
      %cst_30 = arith.constant dense<0.000000e+00> : vector<8xf32>
      %40 = vector.multi_reduction <add>, %39, %cst_30 [1] : vector<8x32xf32> to vector<8xf32>
      %41 = vector.shape_cast %40 : vector<8xf32> to vector<8x1xf32>
      %cst_31 = arith.constant 3.200000e+01 : f32
      %42 = vector.broadcast %cst_31 : f32 to vector<8x1xf32>
      %43 = arith.divf %41, %42 : vector<8x1xf32>
      %44 = vector.broadcast %36 : vector<8x1xf32> to vector<8x32xf32>
      %45 = arith.subf %30, %44 : vector<8x32xf32>
      %cst_32 = arith.constant 9.99999974E-6 : f32
      %46 = vector.broadcast %cst_32 : f32 to vector<8x1xf32>
      %47 = arith.addf %43, %46 : vector<8x1xf32>
      %48 = math.rsqrt %47 : vector<8x1xf32>
      %49 = vector.broadcast %48 : vector<8x1xf32> to vector<8x32xf32>
      %50 = arith.mulf %45, %49 : vector<8x32xf32>
      %51 = vector.broadcast %31 : vector<1x32xf32> to vector<8x32xf32>
      %52 = arith.mulf %50, %51 : vector<8x32xf32>
      %53 = vector.broadcast %32 : vector<1x32xf32> to vector<8x32xf32>
      %54 = arith.addf %52, %53 : vector<8x32xf32>
      %55 = vector.shape_cast %54 : vector<8x32xf32> to vector<1x8x32xf32>
      %c0_33 = arith.constant 0 : index
      %c0_34 = arith.constant 0 : index
      %c0_35 = arith.constant 0 : index
      %56 = vector.load %arg15[%c0_33, %c0_34, %c0_35] : memref<1x8x32xf32, #tpu.memory_space<vmem>>, vector<1x8x32xf32>
      tpu.vector_store %arg15[%c0_33, %c0_34, %c0_35], %55 {strides = array<i32>} : memref<1x8x32xf32, #tpu.memory_space<vmem>>, vector<1x8x32xf32>,
    } else {
    }
    return
  }
  func.func @transform_0(%arg0: i32, %arg1: i32) -> (i32, i32, i32) {
    %c0_i32 = arith.constant 0 : i32
    %c0_i32_0 = arith.constant 0 : i32
    %c0_i32_1 = arith.constant 0 : i32
    return %arg0, %c0_i32, %c0_i32_0 : i32, i32, i32
  }
  func.func @transform_1(%arg0: i32, %arg1: i32) -> (i32, i32) {
    %c0_i32 = arith.constant 0 : i32
    %c0_i32_0 = arith.constant 0 : i32
    %c0_i32_1 = arith.constant 0 : i32
    return %c0_i32, %c0_i32_0 : i32, i32
  }
  func.func @transform_2(%arg0: i32, %arg1: i32) -> (i32, i32) {
    %c0_i32 = arith.constant 0 : i32
    %c0_i32_0 = arith.constant 0 : i32
    %c0_i32_1 = arith.constant 0 : i32
    return %c0_i32, %c0_i32_0 : i32, i32
  }
  func.func @transform_3(%arg0: i32, %arg1: i32) -> (i32, i32) {
    %c0_i32 = arith.constant 0 : i32
    %c0_i32_0 = arith.constant 0 : i32
    %c0_i32_1 = arith.constant 0 : i32
    return %c0_i32, %c0_i32_0 : i32, i32
  }
  func.func @transform_4(%arg0: i32, %arg1: i32) -> (i32, i32) {
    %c0_i32 = arith.constant 0 : i32
    %c0_i32_0 = arith.constant 0 : i32
    %c0_i32_1 = arith.constant 0 : i32
    return %c0_i32, %c0_i32_0 : i32, i32
  }
  func.func @transform_5(%arg0: i32, %arg1: i32) -> (i32, i32) {
    %c0_i32 = arith.constant 0 : i32
    %c0_i32_0 = arith.constant 0 : i32
    %c0_i32_1 = arith.constant 0 : i32
    return %c0_i32, %c0_i32_0 : i32, i32
  }
  func.func @transform_6(%arg0: i32, %arg1: i32) -> (i32, i32) {
    %c0_i32 = arith.constant 0 : i32
    %c0_i32_0 = arith.constant 0 : i32
    %c0_i32_1 = arith.constant 0 : i32
    return %c0_i32, %c0_i32_0 : i32, i32
  }
  func.func @transform_7(%arg0: i32, %arg1: i32) -> (i32, i32) {
    %c0_i32 = arith.constant 0 : i32
    %c0_i32_0 = arith.constant 0 : i32
    %c0_i32_1 = arith.constant 0 : i32
    return %c0_i32, %c0_i32_0 : i32, i32
  }
  func.func @transform_8(%arg0: i32, %arg1: i32) -> (i32, i32) {
    %c0_i32 = arith.constant 0 : i32
    %c0_i32_0 = arith.constant 0 : i32
    %c0_i32_1 = arith.constant 0 : i32
    return %c0_i32, %c0_i32_0 : i32, i32
  }
  func.func @transform_9(%arg0: i32, %arg1: i32) -> (i32, i32) {
    %c0_i32 = arith.constant 0 : i32
    %c0_i32_0 = arith.constant 0 : i32
    %c0_i32_1 = arith.constant 0 : i32
    return %c0_i32, %c0_i32_0 : i32, i32
  }
  func.func @transform_10(%arg0: i32, %arg1: i32) -> (i32, i32) {
    %c0_i32 = arith.constant 0 : i32
    %c0_i32_0 = arith.constant 0 : i32
    %c0_i32_1 = arith.constant 0 : i32
    return %c0_i32, %c0_i32_0 : i32, i32
  }
  func.func @transform_11(%arg0: i32, %arg1: i32) -> (i32, i32) {
    %c0_i32 = arith.constant 0 : i32
    %c0_i32_0 = arith.constant 0 : i32
    %c0_i32_1 = arith.constant 0 : i32
    return %c0_i32, %c0_i32_0 : i32, i32
  }
  func.func @transform_12(%arg0: i32, %arg1: i32) -> (i32, i32) {
    %c0_i32 = arith.constant 0 : i32
    %c0_i32_0 = arith.constant 0 : i32
    %c0_i32_1 = arith.constant 0 : i32
    return %c0_i32, %c0_i32_0 : i32, i32
  }
  func.func @transform_13(%arg0: i32, %arg1: i32) -> (i32, i32, i32) {
    %c0_i32 = arith.constant 0 : i32
    %c0_i32_0 = arith.constant 0 : i32
    %c0_i32_1 = arith.constant 0 : i32
    return %arg0, %c0_i32, %c0_i32_0 : i32, i32, i32
  }
}

</mosaic_0001>

<llo_original>
// kernel: transformer_block.1
$region0: #{transformer_block.1}
  #allocation0 [shape = 'u32[]', space=smem, size = 0x4, offset = 0x4, fixed_abs, tag = 'smem constant byte address 0x4 - core index']
  #allocation1 [shape = 'u32[144,128]{1,0:T(1,128)}', space=vmem, size = 0x12000, scoped, tag = 'internal scratch']
  #allocation2 [shape = 'f32[8,32]{1,0:T(8,128)}', space=vmem, size = 0x1000, scoped, tag = 'scratch operand']
  #allocation3 [shape = 'f32[8,32]{1,0:T(8,128)}', space=vmem, size = 0x1000, scoped, tag = 'scratch operand']
  %s0 = inlined_call_operand.vmem [shape: f32[2,8,32], index: 0, kind: input, shape index: {}]
  %s1 = inlined_call_operand.vmem [shape: f32[32,96], index: 1, kind: input, shape index: {}]
  %s2 = inlined_call_operand.vmem [shape: f32[1,96], index: 2, kind: input, shape index: {}]
  %s3 = inlined_call_operand.vmem [shape: f32[32,32], index: 3, kind: input, shape index: {}]
  %s4 = inlined_call_operand.vmem [shape: f32[1,32], index: 4, kind: input, shape index: {}]
  %s5 = inlined_call_operand.vmem [shape: f32[1,32], index: 5, kind: input, shape index: {}]
  %s6 = inlined_call_operand.vmem [shape: f32[1,32], index: 6, kind: input, shape index: {}]
  %s7 = inlined_call_operand.vmem [shape: f32[32,64], index: 7, kind: input, shape index: {}]
  %s8 = inlined_call_operand.vmem [shape: f32[1,64], index: 8, kind: input, shape index: {}]
  %s9 = inlined_call_operand.vmem [shape: f32[64,32], index: 9, kind: input, shape index: {}]
  %s10 = inlined_call_operand.vmem [shape: f32[1,32], index: 10, kind: input, shape index: {}]
  %s11 = inlined_call_operand.vmem [shape: f32[1,32], index: 11, kind: input, shape index: {}]
  %s12 = inlined_call_operand.vmem [shape: f32[1,32], index: 12, kind: input, shape index: {}]
  %s13 = inlined_call_operand.hbm [shape: f32[2,8,32], index: 13, kind: output, shape index: {}]
  %s14 = sld [smem:[#allocation0]]
  $region93: #{transformer_block.1} parent=0
    _
  %s16 = ssub.s32 1, %s14
  %s17 = scalar_select 0, %s16, %s14
  $region1: #{transformer_block.1} parent=0
    #allocation4 [shape = 'u8[8192]{0}', space=vmem, size = 0x2000, scoped, tag = 'output window, operand 0']
    #allocation5 [shape = 's32[2]{0}', space=sflag, size = 0x8, scoped, tag = 'scoped memory for transformer_block.1']
    %18 = vsyncpa [#allocation5], 0
    %s19 = scalar_lea.sflag [#allocation5], 1
    %20 = vsyncpa %s19, 0
    loop: start=0, step=1, limit=4
    $region2: #{transformer_block.1} parent=1 // loop_pre_header
      _
    $region3: #{transformer_block.1} parent=1 // loop_header
      %s22 = sphi 0, %s26
      %p23 = scmp.ge.s32.totalorder %s22, 4
      %s29 = sphi 0, %s41
      %s30 = sphi 0, %s37
      %s31 = sphi 0, %s29
      %s32 = sphi 0, %s30
      %s33 = sphi 0, %s31
      %s34 = sphi 0, %s32
      %s44 = sphi 0, %s46
      %s47 = sphi 0, %s44
      %s48 = sphi 0, %s47
      %s64 = sphi 0, %s48
      %s68 = sphi 0, %s68
      %s70 = sphi 0, %s68
      %s71 = sphi 0, %s70
      %s85 = sphi 0, %s71
      %s89 = sphi 0, %s89
      %s91 = sphi 0, %s89
      %s92 = sphi 0, %s91
      %s106 = sphi 0, %s92
      %s110 = sphi 0, %s110
      %s112 = sphi 0, %s110
      %s113 = sphi 0, %s112
      %s127 = sphi 0, %s113
      %s131 = sphi 0, %s131
      %s133 = sphi 0, %s131
      %s134 = sphi 0, %s133
      %s148 = sphi 0, %s134
      %s152 = sphi 0, %s152
      %s154 = sphi 0, %s152
      %s155 = sphi 0, %s154
      %s169 = sphi 0, %s155
      %s173 = sphi 0, %s173
      %s175 = sphi 0, %s173
      %s176 = sphi 0, %s175
      %s190 = sphi 0, %s176
      %s194 = sphi 0, %s194
      %s196 = sphi 0, %s194
      %s197 = sphi 0, %s196
      %s211 = sphi 0, %s197
      %s215 = sphi 0, %s215
      %s217 = sphi 0, %s215
      %s218 = sphi 0, %s217
      %s232 = sphi 0, %s218
      %s236 = sphi 0, %s236
      %s238 = sphi 0, %s236
      %s239 = sphi 0, %s238
      %s253 = sphi 0, %s239
      %s257 = sphi 0, %s257
      %s259 = sphi 0, %s257
      %s260 = sphi 0, %s259
      %s274 = sphi 0, %s260
      %s278 = sphi 0, %s278
      %s280 = sphi 0, %s278
      %s281 = sphi 0, %s280
      %s295 = sphi 0, %s281
      %s299 = sphi 0, %s299
      %s301 = sphi 0, %s299
      %s302 = sphi 0, %s301
      %s316 = sphi 0, %s302
      %s322 = sphi 0, %s324
      %s325 = sphi 0, %s322
      %s326 = sphi 0, %s325
      %s342 = sphi 0, %s326
    $region4: #{transformer_block.1} parent=1 // loop_header_branch
      %25 = sbr.rel (%p23) target = $region8
    $region5: #{transformer_block.1} parent=1 // loop_body
      %s27 = ssub.s32 %s22, 1
      %s28 = ssub.s32 %s22, 2
      %s35 = sadd.s32 1, %s30
      %p36 = scmp.ge.s32.totalorder %s35, 1
      %s37 = scalar_select %p36, 0, %s35
      %s38 = sadd.s32 1, %s29
      %s39 = scalar_select %p36, %s38, %s29
      %p40 = scmp.ge.s32.totalorder %s39, 2
      %s41 = scalar_select %p40, 0, %s39
      %s42 = ssub.s32 %s29, %s41
      %p43 = scmp.eq.s32.totalorder %s42, 0
      %s45 = sadd.s32 %s44, 1
      %s46 = scalar_select %p43, %s44, %s45
      %p49 = pneg %p43
      %p50 = scmp.eq.s32.totalorder %s22, 1
      %p51 = por %p49, %p50
      %p52 = scmp.ne.s32.totalorder %s44, %s47
      %p53 = scmp.eq.s32.totalorder %s22, 0
      %p54 = por %p52, %p53
      %p55 = scmp.ne.s32.totalorder %s44, %s47
      %p56 = scmp.eq.s32.totalorder %s27, 1
      %p57 = por %p55, %p56
      %p58 = scmp.ne.s32.totalorder %s47, %s48
      %p59 = scmp.eq.s32.totalorder %s27, 0
      %p60 = por %p58, %p59
      %p61 = scmp.ne.s32.totalorder %s47, %s48
      %p62 = scmp.eq.s32.totalorder %s28, 1
      %p63 = por %p61, %p62
      %p65 = scmp.ne.s32.totalorder %s48, %s64
      %p66 = scmp.eq.s32.totalorder %s28, 0
      %p67 = por %p65, %p66
      %s69 = sadd.s32 %s68, 1
      %p72 = scmp.eq.s32.totalorder %s22, 1
      %p73 = scmp.ne.s32.totalorder %s68, %s70
      %p74 = scmp.eq.s32.totalorder %s22, 0
      %p75 = por %p73, %p74
      %p76 = scmp.ne.s32.totalorder %s68, %s70
      %p77 = scmp.eq.s32.totalorder %s27, 1
      %p78 = por %p76, %p77
      %p79 = scmp.ne.s32.totalorder %s70, %s71
      %p80 = scmp.eq.s32.totalorder %s27, 0
      %p81 = por %p79, %p80
      %p82 = scmp.ne.s32.totalorder %s70, %s71
      %p83 = scmp.eq.s32.totalorder %s28, 1
      %p84 = por %p82, %p83
      %p86 = scmp.ne.s32.totalorder %s71, %s85
      %p87 = scmp.eq.s32.totalorder %s28, 0
      %p88 = por %p86, %p87
      %s90 = sadd.s32 %s89, 1
      %p93 = scmp.eq.s32.totalorder %s22, 1
      %p94 = scmp.ne.s32.totalorder %s89, %s91
      %p95 = scmp.eq.s32.totalorder %s22, 0
      %p96 = por %p94, %p95
      %p97 = scmp.ne.s32.totalorder %s89, %s91
      %p98 = scmp.eq.s32.totalorder %s27, 1
      %p99 = por %p97, %p98
      %p100 = scmp.ne.s32.totalorder %s91, %s92
      %p101 = scmp.eq.s32.totalorder %s27, 0
      %p102 = por %p100, %p101
      %p103 = scmp.ne.s32.totalorder %s91, %s92
      %p104 = scmp.eq.s32.totalorder %s28, 1
      %p105 = por %p103, %p104
      %p107 = scmp.ne.s32.totalorder %s92, %s106
      %p108 = scmp.eq.s32.totalorder %s28, 0
      %p109 = por %p107, %p108
      %s111 = sadd.s32 %s110, 1
      %p114 = scmp.eq.s32.totalorder %s22, 1
      %p115 = scmp.ne.s32.totalorder %s110, %s112
      %p116 = scmp.eq.s32.totalorder %s22, 0
      %p117 = por %p115, %p116
      %p118 = scmp.ne.s32.totalorder %s110, %s112
      %p119 = scmp.eq.s32.totalorder %s27, 1
      %p120 = por %p118, %p119
      %p121 = scmp.ne.s32.totalorder %s112, %s113
      %p122 = scmp.eq.s32.totalorder %s27, 0
      %p123 = por %p121, %p122
      %p124 = scmp.ne.s32.totalorder %s112, %s113
      %p125 = scmp.eq.s32.totalorder %s28, 1
      %p126 = por %p124, %p125
      %p128 = scmp.ne.s32.totalorder %s113, %s127
      %p129 = scmp.eq.s32.totalorder %s28, 0
      %p130 = por %p128, %p129
      %s132 = sadd.s32 %s131, 1
      %p135 = scmp.eq.s32.totalorder %s22, 1
      %p136 = scmp.ne.s32.totalorder %s131, %s133
      %p137 = scmp.eq.s32.totalorder %s22, 0
      %p138 = por %p136, %p137
      %p139 = scmp.ne.s32.totalorder %s131, %s133
      %p140 = scmp.eq.s32.totalorder %s27, 1
      %p141 = por %p139, %p140
      %p142 = scmp.ne.s32.totalorder %s133, %s134
      %p143 = scmp.eq.s32.totalorder %s27, 0
      %p144 = por %p142, %p143
      %p145 = scmp.ne.s32.totalorder %s133, %s134
      %p146 = scmp.eq.s32.totalorder %s28, 1
      %p147 = por %p145, %p146
      %p149 = scmp.ne.s32.totalorder %s134, %s148
      %p150 = scmp.eq.s32.totalorder %s28, 0
      %p151 = por %p149, %p150
      %s153 = sadd.s32 %s152, 1
      %p156 = scmp.eq.s32.totalorder %s22, 1
      %p157 = scmp.ne.s32.totalorder %s152, %s154
      %p158 = scmp.eq.s32.totalorder %s22, 0
      %p159 = por %p157, %p158
      %p160 = scmp.ne.s32.totalorder %s152, %s154
      %p161 = scmp.eq.s32.totalorder %s27, 1
      %p162 = por %p160, %p161
      %p163 = scmp.ne.s32.totalorder %s154, %s155
      %p164 = scmp.eq.s32.totalorder %s27, 0
      %p165 = por %p163, %p164
      %p166 = scmp.ne.s32.totalorder %s154, %s155
      %p167 = scmp.eq.s32.totalorder %s28, 1
      %p168 = por %p166, %p167
      %p170 = scmp.ne.s32.totalorder %s155, %s169
      %p171 = scmp.eq.s32.totalorder %s28, 0
      %p172 = por %p170, %p171
      %s174 = sadd.s32 %s173, 1
      %p177 = scmp.eq.s32.totalorder %s22, 1
      %p178 = scmp.ne.s32.totalorder %s173, %s175
      %p179 = scmp.eq.s32.totalorder %s22, 0
      %p180 = por %p178, %p179
      %p181 = scmp.ne.s32.totalorder %s173, %s175
      %p182 = scmp.eq.s32.totalorder %s27, 1
      %p183 = por %p181, %p182
      %p184 = scmp.ne.s32.totalorder %s175, %s176
      %p185 = scmp.eq.s32.totalorder %s27, 0
      %p186 = por %p184, %p185
      %p187 = scmp.ne.s32.totalorder %s175, %s176
      %p188 = scmp.eq.s32.totalorder %s28, 1
      %p189 = por %p187, %p188
      %p191 = scmp.ne.s32.totalorder %s176, %s190
      %p192 = scmp.eq.s32.totalorder %s28, 0
      %p193 = por %p191, %p192
      %s195 = sadd.s32 %s194, 1
      %p198 = scmp.eq.s32.totalorder %s22, 1
      %p199 = scmp.ne.s32.totalorder %s194, %s196
      %p200 = scmp.eq.s32.totalorder %s22, 0
      %p201 = por %p199, %p200
      %p202 = scmp.ne.s32.totalorder %s194, %s196
      %p203 = scmp.eq.s32.totalorder %s27, 1
      %p204 = por %p202, %p203
      %p205 = scmp.ne.s32.totalorder %s196, %s197
      %p206 = scmp.eq.s32.totalorder %s27, 0
      %p207 = por %p205, %p206
      %p208 = scmp.ne.s32.totalorder %s196, %s197
      %p209 = scmp.eq.s32.totalorder %s28, 1
      %p210 = por %p208, %p209
      %p212 = scmp.ne.s32.totalorder %s197, %s211
      %p213 = scmp.eq.s32.totalorder %s28, 0
      %p214 = por %p212, %p213
      %s216 = sadd.s32 %s215, 1
      %p219 = scmp.eq.s32.totalorder %s22, 1
      %p220 = scmp.ne.s32.totalorder %s215, %s217
      %p221 = scmp.eq.s32.totalorder %s22, 0
      %p222 = por %p220, %p221
      %p223 = scmp.ne.s32.totalorder %s215, %s217
      %p224 = scmp.eq.s32.totalorder %s27, 1
      %p225 = por %p223, %p224
      %p226 = scmp.ne.s32.totalorder %s217, %s218
      %p227 = scmp.eq.s32.totalorder %s27, 0
      %p228 = por %p226, %p227
      %p229 = scmp.ne.s32.totalorder %s217, %s218
      %p230 = scmp.eq.s32.totalorder %s28, 1
      %p231 = por %p229, %p230
      %p233 = scmp.ne.s32.totalorder %s218, %s232
      %p234 = scmp.eq.s32.totalorder %s28, 0
      %p235 = por %p233, %p234
      %s237 = sadd.s32 %s236, 1
      %p240 = scmp.eq.s32.totalorder %s22, 1
      %p241 = scmp.ne.s32.totalorder %s236, %s238
      %p242 = scmp.eq.s32.totalorder %s22, 0
      %p243 = por %p241, %p242
      %p244 = scmp.ne.s32.totalorder %s236, %s238
      %p245 = scmp.eq.s32.totalorder %s27, 1
      %p246 = por %p244, %p245
      %p247 = scmp.ne.s32.totalorder %s238, %s239
      %p248 = scmp.eq.s32.totalorder %s27, 0
      %p249 = por %p247, %p248
      %p250 = scmp.ne.s32.totalorder %s238, %s239
      %p251 = scmp.eq.s32.totalorder %s28, 1
      %p252 = por %p250, %p251
      %p254 = scmp.ne.s32.totalorder %s239, %s253
      %p255 = scmp.eq.s32.totalorder %s28, 0
      %p256 = por %p254, %p255
      %s258 = sadd.s32 %s257, 1
      %p261 = scmp.eq.s32.totalorder %s22, 1
      %p262 = scmp.ne.s32.totalorder %s257, %s259
      %p263 = scmp.eq.s32.totalorder %s22, 0
      %p264 = por %p262, %p263
      %p265 = scmp.ne.s32.totalorder %s257, %s259
      %p266 = scmp.eq.s32.totalorder %s27, 1
      %p267 = por %p265, %p266
      %p268 = scmp.ne.s32.totalorder %s259, %s260
      %p269 = scmp.eq.s32.totalorder %s27, 0
      %p270 = por %p268, %p269
      %p271 = scmp.ne.s32.totalorder %s259, %s260
      %p272 = scmp.eq.s32.totalorder %s28, 1
      %p273 = por %p271, %p272
      %p275 = scmp.ne.s32.totalorder %s260, %s274
      %p276 = scmp.eq.s32.totalorder %s28, 0
      %p277 = por %p275, %p276
      %s279 = sadd.s32 %s278, 1
      %p282 = scmp.eq.s32.totalorder %s22, 1
      %p283 = scmp.ne.s32.totalorder %s278, %s280
      %p284 = scmp.eq.s32.totalorder %s22, 0
      %p285 = por %p283, %p284
      %p286 = scmp.ne.s32.totalorder %s278, %s280
      %p287 = scmp.eq.s32.totalorder %s27, 1
      %p288 = por %p286, %p287
      %p289 = scmp.ne.s32.totalorder %s280, %s281
      %p290 = scmp.eq.s32.totalorder %s27, 0
      %p291 = por %p289, %p290
      %p292 = scmp.ne.s32.totalorder %s280, %s281
      %p293 = scmp.eq.s32.totalorder %s28, 1
      %p294 = por %p292, %p293
      %p296 = scmp.ne.s32.totalorder %s281, %s295
      %p297 = scmp.eq.s32.totalorder %s28, 0
      %p298 = por %p296, %p297
      %s300 = sadd.s32 %s299, 1
      %p303 = scmp.eq.s32.totalorder %s22, 1
      %p304 = scmp.ne.s32.totalorder %s299, %s301
      %p305 = scmp.eq.s32.totalorder %s22, 0
      %p306 = por %p304, %p305
      %p307 = scmp.ne.s32.totalorder %s299, %s301
      %p308 = scmp.eq.s32.totalorder %s27, 1
      %p309 = por %p307, %p308
      %p310 = scmp.ne.s32.totalorder %s301, %s302
      %p311 = scmp.eq.s32.totalorder %s27, 0
      %p312 = por %p310, %p311
      %p313 = scmp.ne.s32.totalorder %s301, %s302
      %p314 = scmp.eq.s32.totalorder %s28, 1
      %p315 = por %p313, %p314
      %p317 = scmp.ne.s32.totalorder %s302, %s316
      %p318 = scmp.eq.s32.totalorder %s28, 0
      %p319 = por %p317, %p318
      %s320 = ssub.s32 %s29, %s41
      %p321 = scmp.eq.s32.totalorder %s320, 0
      %s323 = sadd.s32 %s322, 1
      %s324 = scalar_select %p321, %s322, %s323
      %p327 = pneg %p321
      %p328 = scmp.eq.s32.totalorder %s22, 1
      %p329 = por %p327, %p328
      %p330 = scmp.ne.s32.totalorder %s322, %s325
      %p331 = scmp.eq.s32.totalorder %s22, 0
      %p332 = por %p330, %p331
      %p333 = scmp.ne.s32.totalorder %s322, %s325
      %p334 = scmp.eq.s32.totalorder %s27, 1
      %p335 = por %p333, %p334
      %p336 = scmp.ne.s32.totalorder %s325, %s326
      %p337 = scmp.eq.s32.totalorder %s27, 0
      %p338 = por %p336, %p337
      %p339 = scmp.ne.s32.totalorder %s325, %s326
      %p340 = scmp.eq.s32.totalorder %s28, 1
      %p341 = por %p339, %p340
      %p343 = scmp.ne.s32.totalorder %s326, %s342
      %p344 = scmp.eq.s32.totalorder %s28, 0
      %p345 = por %p343, %p344
      %p346 = scmp.le.s32.totalorder 1, %s22
      %p347 = scmp.lt.s32.totalorder %s22, 3
      %p348 = pnand %p346, %p347
      %p349 = pneg %p348
      // Predicated region
      $region9: #{transformer_block.1} parent=5 // pred_check
        _
      $region10: #{transformer_block.1} parent=5 // pred_check_branch
        %351 = sbr.rel (%p348) target = $region12
      $region11: #{transformer_block.1} parent=5 // pred_region
        %s352 = ssub.s32 %s22, 1
        // Predicated region
        $region13: #{transformer_block.1} parent=11 // pred_check
          %p353 = pneg %p81
        $region14: #{transformer_block.1} parent=11 // pred_check_branch
          %355 = sbr.rel (%p353) target = $region16
        $region15: #{transformer_block.1} parent=11 // pred_region
          _
        $region16: #{transformer_block.1} parent=11 // pred_fallthru
          _
        // Predicated region
        $region17: #{transformer_block.1} parent=11 // pred_check
          %p356 = pneg %p102
        $region18: #{transformer_block.1} parent=11 // pred_check_branch
          %358 = sbr.rel (%p356) target = $region20
        $region19: #{transformer_block.1} parent=11 // pred_region
          _
        $region20: #{transformer_block.1} parent=11 // pred_fallthru
          _
        // Predicated region
        $region21: #{transformer_block.1} parent=11 // pred_check
          %p359 = pneg %p123
        $region22: #{transformer_block.1} parent=11 // pred_check_branch
          %361 = sbr.rel (%p359) target = $region24
        $region23: #{transformer_block.1} parent=11 // pred_region
          _
        $region24: #{transformer_block.1} parent=11 // pred_fallthru
          _
        // Predicated region
        $region25: #{transformer_block.1} parent=11 // pred_check
          %p362 = pneg %p144
        $region26: #{transformer_block.1} parent=11 // pred_check_branch
          %364 = sbr.rel (%p362) target = $region28
        $region27: #{transformer_block.1} parent=11 // pred_region
          _
        $region28: #{transformer_block.1} parent=11 // pred_fallthru
          _
        // Predicated region
        $region29: #{transformer_block.1} parent=11 // pred_check
          %p365 = pneg %p165
        $region30: #{transformer_block.1} parent=11 // pred_check_branch
          %367 = sbr.rel (%p365) target = $region32
        $region31: #{transformer_block.1} parent=11 // pred_region
          _
        $region32: #{transformer_block.1} parent=11 // pred_fallthru
          _
        // Predicated region
        $region33: #{transformer_block.1} parent=11 // pred_check
          %p368 = pneg %p186
        $region34: #{transformer_block.1} parent=11 // pred_check_branch
          %370 = sbr.rel (%p368) target = $region36
        $region35: #{transformer_block.1} parent=11 // pred_region
          _
        $region36: #{transformer_block.1} parent=11 // pred_fallthru
          _
        // Predicated region
        $region37: #{transformer_block.1} parent=11 // pred_check
          %p371 = pneg %p207
        $region38: #{transformer_block.1} parent=11 // pred_check_branch
          %373 = sbr.rel (%p371) target = $region40
        $region39: #{transformer_block.1} parent=11 // pred_region
          _
        $region40: #{transformer_block.1} parent=11 // pred_fallthru
          _
        // Predicated region
        $region41: #{transformer_block.1} parent=11 // pred_check
          %p374 = pneg %p228
        $region42: #{transformer_block.1} parent=11 // pred_check_branch
          %376 = sbr.rel (%p374) target = $region44
        $region43: #{transformer_block.1} parent=11 // pred_region
          _
        $region44: #{transformer_block.1} parent=11 // pred_fallthru
          _
        // Predicated region
        $region45: #{transformer_block.1} parent=11 // pred_check
          %p377 = pneg %p249
        $region46: #{transformer_block.1} parent=11 // pred_check_branch
          %379 = sbr.rel (%p377) target = $region48
        $region47: #{transformer_block.1} parent=11 // pred_region
          _
        $region48: #{transformer_block.1} parent=11 // pred_fallthru
          _
        // Predicated region
        $region49: #{transformer_block.1} parent=11 // pred_check
          %p380 = pneg %p270
        $region50: #{transformer_block.1} parent=11 // pred_check_branch
          %382 = sbr.rel (%p380) target = $region52
        $region51: #{transformer_block.1} parent=11 // pred_region
          _
        $region52: #{transformer_block.1} parent=11 // pred_fallthru
          _
        // Predicated region
        $region53: #{transformer_block.1} parent=11 // pred_check
          %p383 = pneg %p291
        $region54: #{transformer_block.1} parent=11 // pred_check_branch
          %385 = sbr.rel (%p383) target = $region56
        $region55: #{transformer_block.1} parent=11 // pred_region
          _
        $region56: #{transformer_block.1} parent=11 // pred_fallthru
          _
        // Predicated region
        $region57: #{transformer_block.1} parent=11 // pred_check
          %p386 = pneg %p312
        $region58: #{transformer_block.1} parent=11 // pred_check_branch
          %388 = sbr.rel (%p386) target = $region60
        $region59: #{transformer_block.1} parent=11 // pred_region
          _
        $region60: #{transformer_block.1} parent=11 // pred_fallthru
          _
      $region12: #{transformer_block.1} parent=5 // pred_fallthru
        _
      %p389 = scmp.lt.s32.totalorder %s22, 2
      // Predicated region
      $region61: #{transformer_block.1} parent=5 // pred_check
        %p390 = pneg %p389
      $region62: #{transformer_block.1} parent=5 // pred_check_branch
        %392 = sbr.rel (%p390) target = $region64
      $region63: #{transformer_block.1} parent=5 // pred_region
        // Predicated region
        $region65: #{transformer_block.1} parent=63 // pred_check
          %p393 = pneg %p54
        $region66: #{transformer_block.1} parent=63 // pred_check_branch
          %395 = sbr.rel (%p393) target = $region68
        $region67: #{transformer_block.1} parent=63 // pred_region
          %p396 = scmp.lt.s32.totalorder %s29, 1
          %s397 = scalar_select %p396, %s29, 1
          %s398 = smul.addr %s397, 8
          %s399 = scalar_lea.vmem %s0, %s398
        $region68: #{transformer_block.1} parent=63 // pred_fallthru
          _
      $region64: #{transformer_block.1} parent=5 // pred_fallthru
        _
      %p400 = scmp.le.s32.totalorder 1, %s22
      %p401 = scmp.lt.s32.totalorder %s22, 3
      %p402 = pnand %p400, %p401
      %p403 = pneg %p402
      // Predicated region
      $region69: #{transformer_block.1} parent=5 // pred_check
        _
      $region70: #{transformer_block.1} parent=5 // pred_check_branch
        %405 = sbr.rel (%p402) target = $region72
      $region71: #{transformer_block.1} parent=5 // pred_region
        %s406 = ssub.s32 %s22, 1
        %p407 = scmp.lt.s32.totalorder %s31, 1
        %s408 = scalar_select %p407, %s31, 1
        %s409 = smul.addr %s408, 8
        %s410 = scalar_lea.vmem %s0, %s409
        %p411 = pneg %p60
        %p412 = pneg %p57
        %p413 = pneg %p81
        %p414 = pneg %p78
        %p415 = pneg %p102
        %p416 = pneg %p99
        %p417 = pneg %p123
        %p418 = pneg %p120
        %p419 = pneg %p144
        %p420 = pneg %p141
        %p421 = pneg %p165
        %p422 = pneg %p162
        %p423 = pneg %p186
        %p424 = pneg %p183
        %p425 = pneg %p207
        %p426 = pneg %p204
        %p427 = pneg %p228
        %p428 = pneg %p225
        %p429 = pneg %p249
        %p430 = pneg %p246
        %p431 = pneg %p270
        %p432 = pneg %p267
        %p433 = pneg %p291
        %p434 = pneg %p288
        %p435 = pneg %p312
        %p436 = pneg %p309
        %p437 = pneg %p338
        %p438 = pneg %p335
        %s439 = sand.u32 %s325, 1
        %s440 = scalar_lea.sflag [#allocation5], %s439
        %s441 = sand.u32 %s325, 1
        %s442 = smul.addr %s441, 8
        %s443 = scalar_lea.vmem [#allocation4], %s442
        %p444 = scmp.lt.s32.totalorder %s31, 1
        %s445 = scalar_select %p444, %s31, 1
        %s446 = smul.addr %s445, 8
        %s447 = scalar_lea.vmem %s0, %s446
        %p448 = scmp.eq.s32.totalorder %s32, 0
        // Predicated region
        $region73: #{transformer_block.1} parent=71 // pred_check
          %p449 = pneg %p448
        $region74: #{transformer_block.1} parent=71 // pred_check_branch
          %451 = sbr.rel (%p449) target = $region76
        $region75: #{transformer_block.1} parent=71 // pred_region
          %v452 = vld [vmem:[%s447] sm:$0xff]
          %v453 = vld [vmem:[%s1] sm:$0xff]
          %v454 = vld [vmem:[%s1 + $0x8] sm:$0xff]
          %v455 = vld [vmem:[%s1 + $0x10] sm:$0xff]
          %v456 = vld [vmem:[%s1 + $0x18] sm:$0xff]
          %v457 = vld [vmem:[%s2] sm:$0x1]
          %v459 = vlaneseq
          %v460 = vshrl.u32 %v459, 7
          %v461 = vsub.s32 0, %v460
          %v462 = vrot.slane %v457, %v461
          %vm464 = vcmask 261120
          %v466 = vsel %vm464, %v452, 0
          %468 = vmatprep.subr.mxu0 0.0
          %469 = vmatpush1.msra.mxu0 %v453
          %470 = vmatprep.subr.mxu0 0.0
          %471 = vmatpush1.msra.mxu0 %v454
          %472 = vmatprep.subr.mxu0 0.0
          %473 = vmatpush1.msra.mxu0 %v455
          %474 = vmatprep.subr.mxu0 0.0
          %475 = vmatpush1.msra.mxu0 %v456
          %476 = vmatprep.subr.mxu0 0.0
          %477 = vmatpush1.msra.mxu0 0.0
          %478 = vmatprep.subr.mxu0 0.0
          %479 = vmatpush1.msra.mxu0 0.0
          %480 = vmatprep.subr.mxu0 0.0
          %481 = vmatpush1.msra.mxu0 0.0
          %482 = vmatprep.subr.mxu0 0.0
          %483 = vmatpush1.msra.mxu0 0.0
          %484 = vmatprep.subr.mxu0 0.0
          %485 = vmatpush1.msra.mxu0 0.0
          %486 = vmatprep.subr.mxu0 0.0
          %487 = vmatpush1.msra.mxu0 0.0
          %488 = vmatprep.subr.mxu0 0.0
          %489 = vmatpush1.msra.mxu0 0.0
          %490 = vmatprep.subr.mxu0 0.0
          %491 = vmatpush1.msra.mxu0 0.0
          %492 = vmatprep.subr.mxu0 0.0
          %493 = vmatpush1.msra.mxu0 0.0
          %494 = vmatprep.subr.mxu0 0.0
          %495 = vmatpush1.msra.mxu0 0.0
          %496 = vmatprep.subr.mxu0 0.0
          %497 = vmatpush1.msra.mxu0 0.0
          %498 = vmatprep.subr.mxu0 0.0
          %499 = vmatpush1.msra.mxu0 0.0
          %500 = vmatprep.subr.mxu0 0.0
          %501 = vmatpush1.msra.mxu0 0.0
          %502 = vmatprep.subr.mxu0 0.0
          %503 = vmatpush1.msra.mxu0 0.0
          %504 = vmatprep.subr.mxu0 0.0
          %505 = vmatpush1.msra.mxu0 0.0
          %506 = vmatprep.subr.mxu0 0.0
          %507 = vmatpush1.msra.mxu0 0.0
          %508 = vmatprep.subr.mxu0 0.0
          %509 = vmatpush1.msra.mxu0 0.0
          %510 = vmatprep.subr.mxu0 0.0
          %511 = vmatpush1.msra.mxu0 0.0
          %512 = vmatprep.subr.mxu0 0.0
          %513 = vmatpush1.msra.mxu0 0.0
          %514 = vmatprep.subr.mxu0 0.0
          %515 = vmatpush1.msra.mxu0 0.0
          %516 = vmatprep.subr.mxu0 0.0
          %517 = vmatpush1.msra.mxu0 0.0
          %518 = vmatprep.subr.mxu0 0.0
          %519 = vmatpush1.msra.mxu0 0.0
          %520 = vmatprep.subr.mxu0 0.0
          %521 = vmatpush1.msra.mxu0 0.0
          %522 = vmatprep.subr.mxu0 0.0
          %523 = vmatpush1.msra.mxu0 0.0
          %524 = vmatprep.subr.mxu0 0.0
          %525 = vmatpush1.msra.mxu0 0.0
          %526 = vmatprep.subr.mxu0 0.0
          %527 = vmatpush1.msra.mxu0 0.0
          %528 = vmatprep.subr.mxu0 0.0
          %529 = vmatpush1.msra.mxu0 0.0
          %530 = vmatprep.subr.mxu0 0.0
          %531 = vmatpush1.msra.mxu0 0.0
          %532 = vmatprep.mubr.f32.mxu0 0.0
          %533 = vmatmul.mubr.f32.gmra.mrb[0].mxu0 %v466
          %v534 = vpop.f32.mrb[0].mxu0
          %v535 = vadd.f32 %v462, %v534
          %v536 = vpop.f32.mrb[0].mxu0
          %537 = vdwg.mxu0
          %539 = vrot.lane.b32.xlu0 %v535, 96
          %v540 = vpop.permute.xlu0 %539
          %vm541 = vcmask 64512
          %v542 = vsel %vm541, %v535, 0
          %v544 = vsel %vm541, %v540, 0
          %546 = vmatprep.subr.mxu0 0.0
          %547 = vmatpush1.xpose.msra.mxu0 %v544
          %548 = vmatprep.subr.mxu0 0.0
          %549 = vmatpush1.xpose.msra.mxu0 0.0
          %550 = vmatprep.subr.mxu0 0.0
          %551 = vmatpush1.xpose.msra.mxu0 0.0
          %552 = vmatprep.subr.mxu0 0.0
          %553 = vmatpush1.xpose.msra.mxu0 0.0
          %554 = vmatprep.subr.mxu0 0.0
          %555 = vmatpush1.xpose.msra.mxu0 0.0
          %556 = vmatprep.subr.mxu0 0.0
          %557 = vmatpush1.xpose.msra.mxu0 0.0
          %558 = vmatprep.subr.mxu0 0.0
          %559 = vmatpush1.xpose.msra.mxu0 0.0
          %560 = vmatprep.subr.mxu0 0.0
          %561 = vmatpush1.xpose.msra.mxu0 0.0
          %562 = vmatprep.subr.mxu0 0.0
          %563 = vmatpush1.xpose.msra.mxu0 0.0
          %564 = vmatprep.subr.mxu0 0.0
          %565 = vmatpush1.xpose.msra.mxu0 0.0
          %566 = vmatprep.subr.mxu0 0.0
          %567 = vmatpush1.xpose.msra.mxu0 0.0
          %568 = vmatprep.subr.mxu0 0.0
          %569 = vmatpush1.xpose.msra.mxu0 0.0
          %570 = vmatprep.subr.mxu0 0.0
          %571 = vmatpush1.xpose.msra.mxu0 0.0
          %572 = vmatprep.subr.mxu0 0.0
          %573 = vmatpush1.xpose.msra.mxu0 0.0
          %574 = vmatprep.subr.mxu0 0.0
          %575 = vmatpush1.xpose.msra.mxu0 0.0
          %576 = vmatprep.subr.mxu0 0.0
          %577 = vmatpush1.xpose.msra.mxu0 0.0
          %578 = vmatprep.subr.mxu0 0.0
          %579 = vmatpush1.xpose.msra.mxu0 0.0
          %580 = vmatprep.subr.mxu0 0.0
          %581 = vmatpush1.xpose.msra.mxu0 0.0
          %582 = vmatprep.subr.mxu0 0.0
          %583 = vmatpush1.xpose.msra.mxu0 0.0
          %584 = vmatprep.subr.mxu0 0.0
          %585 = vmatpush1.xpose.msra.mxu0 0.0
          %586 = vmatprep.subr.mxu0 0.0
          %587 = vmatpush1.xpose.msra.mxu0 0.0
          %588 = vmatprep.subr.mxu0 0.0
          %589 = vmatpush1.xpose.msra.mxu0 0.0
          %590 = vmatprep.subr.mxu0 0.0
          %591 = vmatpush1.xpose.msra.mxu0 0.0
          %592 = vmatprep.subr.mxu0 0.0
          %593 = vmatpush1.xpose.msra.mxu0 0.0
          %594 = vmatprep.subr.mxu0 0.0
          %595 = vmatpush1.xpose.msra.mxu0 0.0
          %596 = vmatprep.subr.mxu0 0.0
          %597 = vmatpush1.xpose.msra.mxu0 0.0
          %598 = vmatprep.subr.mxu0 0.0
          %599 = vmatpush1.xpose.msra.mxu0 0.0
          %600 = vmatprep.subr.mxu0 0.0
          %601 = vmatpush1.xpose.msra.mxu0 0.0
          %602 = vmatprep.subr.mxu0 0.0
          %603 = vmatpush1.xpose.msra.mxu0 0.0
          %604 = vmatprep.subr.mxu0 0.0
          %605 = vmatpush1.xpose.msra.mxu0 0.0
          %606 = vmatprep.subr.mxu0 0.0
          %607 = vmatpush1.xpose.msra.mxu0 0.0
          %608 = vmatprep.subr.mxu0 0.0
          %609 = vmatpush1.xpose.msra.mxu0 0.0
          %610 = vmatprep.mubr.f32.mxu0 0.0
          %611 = vmatmul.mubr.f32.gmra.mrb[0].mxu0 %v542
          %v612 = vpop.f32.mrb[0].mxu0
          %v613 = vadd.f32 0.0, %v612
          %v614 = vpop.f32.mrb[0].mxu0
          %615 = vdwg.mxu0
          %v616 = vsel %vm541, %v613, -inf
          %617 = vmax.xlane.f32.xlu0 %v616
          %v618 = vpop.xlane.xlu0 %617
          %v619 = vsub.f32 %v613, %v618
          %v620 = vmul.f32 %v619, 1.442695
          %v621 = vpow.pop %v620
          %v622 = vsel %vm541, %v621, 0.0
          %623 = vadd.xlane.f32.xlu0 %v622
          %v624 = vpop.xlane.xlu0 %623
          %625 = vrot.lane.b32.xlu0 %v535, 64
          %v626 = vpop.permute.xlu0 %625
          %v629 = vsel %vm541, %v621, 0
          %631 = vmatprep.subr.mxu0 0.0
          %632 = vmatpush1.msra.mxu0 %v626
          %633 = vmatprep.subr.mxu0 0.0
          %634 = vmatpush1.msra.mxu0 0.0
          %635 = vmatprep.subr.mxu0 0.0
          %636 = vmatpush1.msra.mxu0 0.0
          %637 = vmatprep.subr.mxu0 0.0
          %638 = vmatpush1.msra.mxu0 0.0
          %639 = vmatprep.subr.mxu0 0.0
          %640 = vmatpush1.msra.mxu0 0.0
          %641 = vmatprep.subr.mxu0 0.0
          %642 = vmatpush1.msra.mxu0 0.0
          %643 = vmatprep.subr.mxu0 0.0
          %644 = vmatpush1.msra.mxu0 0.0
          %645 = vmatprep.subr.mxu0 0.0
          %646 = vmatpush1.msra.mxu0 0.0
          %647 = vmatprep.subr.mxu0 0.0
          %648 = vmatpush1.msra.mxu0 0.0
          %649 = vmatprep.subr.mxu0 0.0
          %650 = vmatpush1.msra.mxu0 0.0
          %651 = vmatprep.subr.mxu0 0.0
          %652 = vmatpush1.msra.mxu0 0.0
          %653 = vmatprep.subr.mxu0 0.0
          %654 = vmatpush1.msra.mxu0 0.0
          %655 = vmatprep.subr.mxu0 0.0
          %656 = vmatpush1.msra.mxu0 0.0
          %657 = vmatprep.subr.mxu0 0.0
          %658 = vmatpush1.msra.mxu0 0.0
          %659 = vmatprep.subr.mxu0 0.0
          %660 = vmatpush1.msra.mxu0 0.0
          %661 = vmatprep.subr.mxu0 0.0
          %662 = vmatpush1.msra.mxu0 0.0
          %663 = vmatprep.subr.mxu0 0.0
          %664 = vmatpush1.msra.mxu0 0.0
          %665 = vmatprep.subr.mxu0 0.0
          %666 = vmatpush1.msra.mxu0 0.0
          %667 = vmatprep.subr.mxu0 0.0
          %668 = vmatpush1.msra.mxu0 0.0
          %669 = vmatprep.subr.mxu0 0.0
          %670 = vmatpush1.msra.mxu0 0.0
          %671 = vmatprep.subr.mxu0 0.0
          %672 = vmatpush1.msra.mxu0 0.0
          %673 = vmatprep.subr.mxu0 0.0
          %674 = vmatpush1.msra.mxu0 0.0
          %675 = vmatprep.subr.mxu0 0.0
          %676 = vmatpush1.msra.mxu0 0.0
          %677 = vmatprep.subr.mxu0 0.0
          %678 = vmatpush1.msra.mxu0 0.0
          %679 = vmatprep.subr.mxu0 0.0
          %680 = vmatpush1.msra.mxu0 0.0
          %681 = vmatprep.subr.mxu0 0.0
          %682 = vmatpush1.msra.mxu0 0.0
          %683 = vmatprep.subr.mxu0 0.0
          %684 = vmatpush1.msra.mxu0 0.0
          %685 = vmatprep.subr.mxu0 0.0
          %686 = vmatpush1.msra.mxu0 0.0
          %687 = vmatprep.subr.mxu0 0.0
          %688 = vmatpush1.msra.mxu0 0.0
          %689 = vmatprep.subr.mxu0 0.0
          %690 = vmatpush1.msra.mxu0 0.0
          %691 = vmatprep.subr.mxu0 0.0
          %692 = vmatpush1.msra.mxu0 0.0
          %693 = vmatprep.subr.mxu0 0.0
          %694 = vmatpush1.msra.mxu0 0.0
          %695 = vmatprep.mubr.f32.mxu0 0.0
          %696 = vmatmul.mubr.f32.gmra.mrb[0].mxu0 %v629
          %v697 = vpop.f32.mrb[0].mxu0
          %v698 = vadd.f32 0.0, %v697
          %v699 = vpop.f32.mrb[0].mxu0
          %700 = vdwg.mxu0
          %v701 = vrcp.pop %v624
          %v702 = vmul.f32 1.0, %v701
          %v703 = vmul.f32 %v698, %v702
          %704 = vst.msk [vmem:[#allocation2] sm:$0xff] %vm541, %v703
          %705 = vrot.lane.b32.xlu0 %v535, 120
          %v706 = vpop.permute.xlu0 %705
          %707 = vrot.lane.b32.xlu0 %v535, 88
          %v708 = vpop.permute.xlu0 %707
          %v709 = vsel %vm541, %v706, 0
          %v711 = vsel %vm541, %v708, 0
          %713 = vmatprep.subr.mxu0 0.0
          %714 = vmatpush1.xpose.msra.mxu0 %v711
          %715 = vmatprep.subr.mxu0 0.0
          %716 = vmatpush1.xpose.msra.mxu0 0.0
          %717 = vmatprep.subr.mxu0 0.0
          %718 = vmatpush1.xpose.msra.mxu0 0.0
          %719 = vmatprep.subr.mxu0 0.0
          %720 = vmatpush1.xpose.msra.mxu0 0.0
          %721 = vmatprep.subr.mxu0 0.0
          %722 = vmatpush1.xpose.msra.mxu0 0.0
          %723 = vmatprep.subr.mxu0 0.0
          %724 = vmatpush1.xpose.msra.mxu0 0.0
          %725 = vmatprep.subr.mxu0 0.0
          %726 = vmatpush1.xpose.msra.mxu0 0.0
          %727 = vmatprep.subr.mxu0 0.0
          %728 = vmatpush1.xpose.msra.mxu0 0.0
          %729 = vmatprep.subr.mxu0 0.0
          %730 = vmatpush1.xpose.msra.mxu0 0.0
          %731 = vmatprep.subr.mxu0 0.0
          %732 = vmatpush1.xpose.msra.mxu0 0.0
          %733 = vmatprep.subr.mxu0 0.0
          %734 = vmatpush1.xpose.msra.mxu0 0.0
          %735 = vmatprep.subr.mxu0 0.0
          %736 = vmatpush1.xpose.msra.mxu0 0.0
          %737 = vmatprep.subr.mxu0 0.0
          %738 = vmatpush1.xpose.msra.mxu0 0.0
          %739 = vmatprep.subr.mxu0 0.0
          %740 = vmatpush1.xpose.msra.mxu0 0.0
          %741 = vmatprep.subr.mxu0 0.0
          %742 = vmatpush1.xpose.msra.mxu0 0.0
          %743 = vmatprep.subr.mxu0 0.0
          %744 = vmatpush1.xpose.msra.mxu0 0.0
          %745 = vmatprep.subr.mxu0 0.0
          %746 = vmatpush1.xpose.msra.mxu0 0.0
          %747 = vmatprep.subr.mxu0 0.0
          %748 = vmatpush1.xpose.msra.mxu0 0.0
          %749 = vmatprep.subr.mxu0 0.0
          %750 = vmatpush1.xpose.msra.mxu0 0.0
          %751 = vmatprep.subr.mxu0 0.0
          %752 = vmatpush1.xpose.msra.mxu0 0.0
          %753 = vmatprep.subr.mxu0 0.0
          %754 = vmatpush1.xpose.msra.mxu0 0.0
          %755 = vmatprep.subr.mxu0 0.0
          %756 = vmatpush1.xpose.msra.mxu0 0.0
          %757 = vmatprep.subr.mxu0 0.0
          %758 = vmatpush1.xpose.msra.mxu0 0.0
          %759 = vmatprep.subr.mxu0 0.0
          %760 = vmatpush1.xpose.msra.mxu0 0.0
          %761 = vmatprep.subr.mxu0 0.0
          %762 = vmatpush1.xpose.msra.mxu0 0.0
          %763 = vmatprep.subr.mxu0 0.0
          %764 = vmatpush1.xpose.msra.mxu0 0.0
          %765 = vmatprep.subr.mxu0 0.0
          %766 = vmatpush1.xpose.msra.mxu0 0.0
          %767 = vmatprep.subr.mxu0 0.0
          %768 = vmatpush1.xpose.msra.mxu0 0.0
          %769 = vmatprep.subr.mxu0 0.0
          %770 = vmatpush1.xpose.msra.mxu0 0.0
          %771 = vmatprep.subr.mxu0 0.0
          %772 = vmatpush1.xpose.msra.mxu0 0.0
          %773 = vmatprep.subr.mxu0 0.0
          %774 = vmatpush1.xpose.msra.mxu0 0.0
          %775 = vmatprep.subr.mxu0 0.0
          %776 = vmatpush1.xpose.msra.mxu0 0.0
          %777 = vmatprep.mubr.f32.mxu0 0.0
          %778 = vmatmul.mubr.f32.gmra.mrb[0].mxu0 %v709
          %v779 = vpop.f32.mrb[0].mxu0
          %v780 = vadd.f32 0.0, %v779
          %v781 = vpop.f32.mrb[0].mxu0
          %782 = vdwg.mxu0
          %v783 = vsel %vm541, %v780, -inf
          %784 = vmax.xlane.f32.xlu0 %v783
          %v785 = vpop.xlane.xlu0 %784
          %v786 = vsub.f32 %v780, %v785
          %v787 = vmul.f32 %v786, 1.442695
          %v788 = vpow.pop %v787
          %v789 = vsel %vm541, %v788, 0.0
          %790 = vadd.xlane.f32.xlu0 %v789
          %v791 = vpop.xlane.xlu0 %790
          %792 = vrot.lane.b32.xlu0 %v535, 56
          %v793 = vpop.permute.xlu0 %792
          %v796 = vsel %vm541, %v788, 0
          %798 = vmatprep.subr.mxu0 0.0
          %799 = vmatpush1.msra.mxu0 %v793
          %800 = vmatprep.subr.mxu0 0.0
          %801 = vmatpush1.msra.mxu0 0.0
          %802 = vmatprep.subr.mxu0 0.0
          %803 = vmatpush1.msra.mxu0 0.0
          %804 = vmatprep.subr.mxu0 0.0
          %805 = vmatpush1.msra.mxu0 0.0
          %806 = vmatprep.subr.mxu0 0.0
          %807 = vmatpush1.msra.mxu0 0.0
          %808 = vmatprep.subr.mxu0 0.0
          %809 = vmatpush1.msra.mxu0 0.0
          %810 = vmatprep.subr.mxu0 0.0
          %811 = vmatpush1.msra.mxu0 0.0
          %812 = vmatprep.subr.mxu0 0.0
          %813 = vmatpush1.msra.mxu0 0.0
          %814 = vmatprep.subr.mxu0 0.0
          %815 = vmatpush1.msra.mxu0 0.0
          %816 = vmatprep.subr.mxu0 0.0
          %817 = vmatpush1.msra.mxu0 0.0
          %818 = vmatprep.subr.mxu0 0.0
          %819 = vmatpush1.msra.mxu0 0.0
          %820 = vmatprep.subr.mxu0 0.0
          %821 = vmatpush1.msra.mxu0 0.0
          %822 = vmatprep.subr.mxu0 0.0
          %823 = vmatpush1.msra.mxu0 0.0
          %824 = vmatprep.subr.mxu0 0.0
          %825 = vmatpush1.msra.mxu0 0.0
          %826 = vmatprep.subr.mxu0 0.0
          %827 = vmatpush1.msra.mxu0 0.0
          %828 = vmatprep.subr.mxu0 0.0
          %829 = vmatpush1.msra.mxu0 0.0
          %830 = vmatprep.subr.mxu0 0.0
          %831 = vmatpush1.msra.mxu0 0.0
          %832 = vmatprep.subr.mxu0 0.0
          %833 = vmatpush1.msra.mxu0 0.0
          %834 = vmatprep.subr.mxu0 0.0
          %835 = vmatpush1.msra.mxu0 0.0
          %836 = vmatprep.subr.mxu0 0.0
          %837 = vmatpush1.msra.mxu0 0.0
          %838 = vmatprep.subr.mxu0 0.0
          %839 = vmatpush1.msra.mxu0 0.0
          %840 = vmatprep.subr.mxu0 0.0
          %841 = vmatpush1.msra.mxu0 0.0
          %842 = vmatprep.subr.mxu0 0.0
          %843 = vmatpush1.msra.mxu0 0.0
          %844 = vmatprep.subr.mxu0 0.0
          %845 = vmatpush1.msra.mxu0 0.0
          %846 = vmatprep.subr.mxu0 0.0
          %847 = vmatpush1.msra.mxu0 0.0
          %848 = vmatprep.subr.mxu0 0.0
          %849 = vmatpush1.msra.mxu0 0.0
          %850 = vmatprep.subr.mxu0 0.0
          %851 = vmatpush1.msra.mxu0 0.0
          %852 = vmatprep.subr.mxu0 0.0
          %853 = vmatpush1.msra.mxu0 0.0
          %854 = vmatprep.subr.mxu0 0.0
          %855 = vmatpush1.msra.mxu0 0.0
          %856 = vmatprep.subr.mxu0 0.0
          %857 = vmatpush1.msra.mxu0 0.0
          %858 = vmatprep.subr.mxu0 0.0
          %859 = vmatpush1.msra.mxu0 0.0
          %860 = vmatprep.subr.mxu0 0.0
          %861 = vmatpush1.msra.mxu0 0.0
          %862 = vmatprep.mubr.f32.mxu0 0.0
          %863 = vmatmul.mubr.f32.gmra.mrb[0].mxu0 %v796
          %v864 = vpop.f32.mrb[0].mxu0
          %v865 = vadd.f32 0.0, %v864
          %v866 = vpop.f32.mrb[0].mxu0
          %867 = vdwg.mxu0
          %v868 = vrcp.pop %v791
          %v869 = vmul.f32 1.0, %v868
          %v870 = vmul.f32 %v865, %v869
          %872 = vrot.lane.b32.xlu0 %v870, 8
          %v873 = vpop.permute.xlu0 %872
          %vm875 = vcmask 130112
          %876 = vst.msk [vmem:[#allocation2] sm:$0xff] %vm875, %v873
          %877 = vrot.lane.b32.xlu0 %v535, 112
          %v878 = vpop.permute.xlu0 %877
          %879 = vrot.lane.b32.xlu0 %v535, 80
          %v880 = vpop.permute.xlu0 %879
          %v881 = vsel %vm541, %v878, 0
          %v883 = vsel %vm541, %v880, 0
          %885 = vmatprep.subr.mxu0 0.0
          %886 = vmatpush1.xpose.msra.mxu0 %v883
          %887 = vmatprep.subr.mxu0 0.0
          %888 = vmatpush1.xpose.msra.mxu0 0.0
          %889 = vmatprep.subr.mxu0 0.0
          %890 = vmatpush1.xpose.msra.mxu0 0.0
          %891 = vmatprep.subr.mxu0 0.0
          %892 = vmatpush1.xpose.msra.mxu0 0.0
          %893 = vmatprep.subr.mxu0 0.0
          %894 = vmatpush1.xpose.msra.mxu0 0.0
          %895 = vmatprep.subr.mxu0 0.0
          %896 = vmatpush1.xpose.msra.mxu0 0.0
          %897 = vmatprep.subr.mxu0 0.0
          %898 = vmatpush1.xpose.msra.mxu0 0.0
          %899 = vmatprep.subr.mxu0 0.0
          %900 = vmatpush1.xpose.msra.mxu0 0.0
          %901 = vmatprep.subr.mxu0 0.0
          %902 = vmatpush1.xpose.msra.mxu0 0.0
          %903 = vmatprep.subr.mxu0 0.0
          %904 = vmatpush1.xpose.msra.mxu0 0.0
          %905 = vmatprep.subr.mxu0 0.0
          %906 = vmatpush1.xpose.msra.mxu0 0.0
          %907 = vmatprep.subr.mxu0 0.0
          %908 = vmatpush1.xpose.msra.mxu0 0.0
          %909 = vmatprep.subr.mxu0 0.0
          %910 = vmatpush1.xpose.msra.mxu0 0.0
          %911 = vmatprep.subr.mxu0 0.0
          %912 = vmatpush1.xpose.msra.mxu0 0.0
          %913 = vmatprep.subr.mxu0 0.0
          %914 = vmatpush1.xpose.msra.mxu0 0.0
          %915 = vmatprep.subr.mxu0 0.0
          %916 = vmatpush1.xpose.msra.mxu0 0.0
          %917 = vmatprep.subr.mxu0 0.0
          %918 = vmatpush1.xpose.msra.mxu0 0.0
          %919 = vmatprep.subr.mxu0 0.0
          %920 = vmatpush1.xpose.msra.mxu0 0.0
          %921 = vmatprep.subr.mxu0 0.0
          %922 = vmatpush1.xpose.msra.mxu0 0.0
          %923 = vmatprep.subr.mxu0 0.0
          %924 = vmatpush1.xpose.msra.mxu0 0.0
          %925 = vmatprep.subr.mxu0 0.0
          %926 = vmatpush1.xpose.msra.mxu0 0.0
          %927 = vmatprep.subr.mxu0 0.0
          %928 = vmatpush1.xpose.msra.mxu0 0.0
          %929 = vmatprep.subr.mxu0 0.0
          %930 = vmatpush1.xpose.msra.mxu0 0.0
          %931 = vmatprep.subr.mxu0 0.0
          %932 = vmatpush1.xpose.msra.mxu0 0.0
          %933 = vmatprep.subr.mxu0 0.0
          %934 = vmatpush1.xpose.msra.mxu0 0.0
          %935 = vmatprep.subr.mxu0 0.0
          %936 = vmatpush1.xpose.msra.mxu0 0.0
          %937 = vmatprep.subr.mxu0 0.0
          %938 = vmatpush1.xpose.msra.mxu0 0.0
          %939 = vmatprep.subr.mxu0 0.0
          %940 = vmatpush1.xpose.msra.mxu0 0.0
          %941 = vmatprep.subr.mxu0 0.0
          %942 = vmatpush1.xpose.msra.mxu0 0.0
          %943 = vmatprep.subr.mxu0 0.0
          %944 = vmatpush1.xpose.msra.mxu0 0.0
          %945 = vmatprep.subr.mxu0 0.0
          %946 = vmatpush1.xpose.msra.mxu0 0.0
          %947 = vmatprep.subr.mxu0 0.0
          %948 = vmatpush1.xpose.msra.mxu0 0.0
          %949 = vmatprep.mubr.f32.mxu0 0.0
          %950 = vmatmul.mubr.f32.gmra.mrb[0].mxu0 %v881
          %v951 = vpop.f32.mrb[0].mxu0
          %v952 = vadd.f32 0.0, %v951
          %v953 = vpop.f32.mrb[0].mxu0
          %954 = vdwg.mxu0
          %v955 = vsel %vm541, %v952, -inf
          %956 = vmax.xlane.f32.xlu0 %v955
          %v957 = vpop.xlane.xlu0 %956
          %v958 = vsub.f32 %v952, %v957
          %v959 = vmul.f32 %v958, 1.442695
          %v960 = vpow.pop %v959
          %v961 = vsel %vm541, %v960, 0.0
          %962 = vadd.xlane.f32.xlu0 %v961
          %v963 = vpop.xlane.xlu0 %962
          %964 = vrot.lane.b32.xlu0 %v535, 48
          %v965 = vpop.permute.xlu0 %964
          %v968 = vsel %vm541, %v960, 0
          %970 = vmatprep.subr.mxu0 0.0
          %971 = vmatpush1.msra.mxu0 %v965
          %972 = vmatprep.subr.mxu0 0.0
          %973 = vmatpush1.msra.mxu0 0.0
          %974 = vmatprep.subr.mxu0 0.0
          %975 = vmatpush1.msra.mxu0 0.0
          %976 = vmatprep.subr.mxu0 0.0
          %977 = vmatpush1.msra.mxu0 0.0
          %978 = vmatprep.subr.mxu0 0.0
          %979 = vmatpush1.msra.mxu0 0.0
          %980 = vmatprep.subr.mxu0 0.0
          %981 = vmatpush1.msra.mxu0 0.0
          %982 = vmatprep.subr.mxu0 0.0
          %983 = vmatpush1.msra.mxu0 0.0
          %984 = vmatprep.subr.mxu0 0.0
          %985 = vmatpush1.msra.mxu0 0.0
          %986 = vmatprep.subr.mxu0 0.0
          %987 = vmatpush1.msra.mxu0 0.0
          %988 = vmatprep.subr.mxu0 0.0
          %989 = vmatpush1.msra.mxu0 0.0
          %990 = vmatprep.subr.mxu0 0.0
          %991 = vmatpush1.msra.mxu0 0.0
          %992 = vmatprep.subr.mxu0 0.0
          %993 = vmatpush1.msra.mxu0 0.0
          %994 = vmatprep.subr.mxu0 0.0
          %995 = vmatpush1.msra.mxu0 0.0
          %996 = vmatprep.subr.mxu0 0.0
          %997 = vmatpush1.msra.mxu0 0.0
          %998 = vmatprep.subr.mxu0 0.0
          %999 = vmatpush1.msra.mxu0 0.0
          %1000 = vmatprep.subr.mxu0 0.0
          %1001 = vmatpush1.msra.mxu0 0.0
          %1002 = vmatprep.subr.mxu0 0.0
          %1003 = vmatpush1.msra.mxu0 0.0
          %1004 = vmatprep.subr.mxu0 0.0
          %1005 = vmatpush1.msra.mxu0 0.0
          %1006 = vmatprep.subr.mxu0 0.0
          %1007 = vmatpush1.msra.mxu0 0.0
          %1008 = vmatprep.subr.mxu0 0.0
          %1009 = vmatpush1.msra.mxu0 0.0
          %1010 = vmatprep.subr.mxu0 0.0
          %1011 = vmatpush1.msra.mxu0 0.0
          %1012 = vmatprep.subr.mxu0 0.0
          %1013 = vmatpush1.msra.mxu0 0.0
          %1014 = vmatprep.subr.mxu0 0.0
          %1015 = vmatpush1.msra.mxu0 0.0
          %1016 = vmatprep.subr.mxu0 0.0
          %1017 = vmatpush1.msra.mxu0 0.0
          %1018 = vmatprep.subr.mxu0 0.0
          %1019 = vmatpush1.msra.mxu0 0.0
          %1020 = vmatprep.subr.mxu0 0.0
          %1021 = vmatpush1.msra.mxu0 0.0
          %1022 = vmatprep.subr.mxu0 0.0
          %1023 = vmatpush1.msra.mxu0 0.0
          %1024 = vmatprep.subr.mxu0 0.0
          %1025 = vmatpush1.msra.mxu0 0.0
          %1026 = vmatprep.subr.mxu0 0.0
          %1027 = vmatpush1.msra.mxu0 0.0
          %1028 = vmatprep.subr.mxu0 0.0
          %1029 = vmatpush1.msra.mxu0 0.0
          %1030 = vmatprep.subr.mxu0 0.0
          %1031 = vmatpush1.msra.mxu0 0.0
          %1032 = vmatprep.subr.mxu0 0.0
          %1033 = vmatpush1.msra.mxu0 0.0
          %1034 = vmatprep.mubr.f32.mxu0 0.0
          %1035 = vmatmul.mubr.f32.gmra.mrb[0].mxu0 %v968
          %v1036 = vpop.f32.mrb[0].mxu0
          %v1037 = vadd.f32 0.0, %v1036
          %v1038 = vpop.f32.mrb[0].mxu0
          %1039 = vdwg.mxu0
          %v1040 = vrcp.pop %v963
          %v1041 = vmul.f32 1.0, %v1040
          %v1042 = vmul.f32 %v1037, %v1041
          %1044 = vrot.lane.b32.xlu0 %v1042, 16
          %v1045 = vpop.permute.xlu0 %1044
          %vm1047 = vcmask 195712
          %1048 = vst.msk [vmem:[#allocation2] sm:$0xff] %vm1047, %v1045
          %1049 = vrot.lane.b32.xlu0 %v535, 104
          %v1050 = vpop.permute.xlu0 %1049
          %1051 = vrot.lane.b32.xlu0 %v535, 72
          %v1052 = vpop.permute.xlu0 %1051
          %v1053 = vsel %vm541, %v1050, 0
          %v1055 = vsel %vm541, %v1052, 0
          %1057 = vmatprep.subr.mxu0 0.0
          %1058 = vmatpush1.xpose.msra.mxu0 %v1055
          %1059 = vmatprep.subr.mxu0 0.0
          %1060 = vmatpush1.xpose.msra.mxu0 0.0
          %1061 = vmatprep.subr.mxu0 0.0
          %1062 = vmatpush1.xpose.msra.mxu0 0.0
          %1063 = vmatprep.subr.mxu0 0.0
          %1064 = vmatpush1.xpose.msra.mxu0 0.0
          %1065 = vmatprep.subr.mxu0 0.0
          %1066 = vmatpush1.xpose.msra.mxu0 0.0
          %1067 = vmatprep.subr.mxu0 0.0
          %1068 = vmatpush1.xpose.msra.mxu0 0.0
          %1069 = vmatprep.subr.mxu0 0.0
          %1070 = vmatpush1.xpose.msra.mxu0 0.0
          %1071 = vmatprep.subr.mxu0 0.0
          %1072 = vmatpush1.xpose.msra.mxu0 0.0
          %1073 = vmatprep.subr.mxu0 0.0
          %1074 = vmatpush1.xpose.msra.mxu0 0.0
          %1075 = vmatprep.subr.mxu0 0.0
          %1076 = vmatpush1.xpose.msra.mxu0 0.0
          %1077 = vmatprep.subr.mxu0 0.0
          %1078 = vmatpush1.xpose.msra.mxu0 0.0
          %1079 = vmatprep.subr.mxu0 0.0
          %1080 = vmatpush1.xpose.msra.mxu0 0.0
          %1081 = vmatprep.subr.mxu0 0.0
          %1082 = vmatpush1.xpose.msra.mxu0 0.0
          %1083 = vmatprep.subr.mxu0 0.0
          %1084 = vmatpush1.xpose.msra.mxu0 0.0
          %1085 = vmatprep.subr.mxu0 0.0
          %1086 = vmatpush1.xpose.msra.mxu0 0.0
          %1087 = vmatprep.subr.mxu0 0.0
          %1088 = vmatpush1.xpose.msra.mxu0 0.0
          %1089 = vmatprep.subr.mxu0 0.0
          %1090 = vmatpush1.xpose.msra.mxu0 0.0
          %1091 = vmatprep.subr.mxu0 0.0
          %1092 = vmatpush1.xpose.msra.mxu0 0.0
          %1093 = vmatprep.subr.mxu0 0.0
          %1094 = vmatpush1.xpose.msra.mxu0 0.0
          %1095 = vmatprep.subr.mxu0 0.0
          %1096 = vmatpush1.xpose.msra.mxu0 0.0
          %1097 = vmatprep.subr.mxu0 0.0
          %1098 = vmatpush1.xpose.msra.mxu0 0.0
          %1099 = vmatprep.subr.mxu0 0.0
          %1100 = vmatpush1.xpose.msra.mxu0 0.0
          %1101 = vmatprep.subr.mxu0 0.0
          %1102 = vmatpush1.xpose.msra.mxu0 0.0
          %1103 = vmatprep.subr.mxu0 0.0
          %1104 = vmatpush1.xpose.msra.mxu0 0.0
          %1105 = vmatprep.subr.mxu0 0.0
          %1106 = vmatpush1.xpose.msra.mxu0 0.0
          %1107 = vmatprep.subr.mxu0 0.0
          %1108 = vmatpush1.xpose.msra.mxu0 0.0
          %1109 = vmatprep.subr.mxu0 0.0
          %1110 = vmatpush1.xpose.msra.mxu0 0.0
          %1111 = vmatprep.subr.mxu0 0.0
          %1112 = vmatpush1.xpose.msra.mxu0 0.0
          %1113 = vmatprep.subr.mxu0 0.0
          %1114 = vmatpush1.xpose.msra.mxu0 0.0
          %1115 = vmatprep.subr.mxu0 0.0
          %1116 = vmatpush1.xpose.msra.mxu0 0.0
          %1117 = vmatprep.subr.mxu0 0.0
          %1118 = vmatpush1.xpose.msra.mxu0 0.0
          %1119 = vmatprep.subr.mxu0 0.0
          %1120 = vmatpush1.xpose.msra.mxu0 0.0
          %1121 = vmatprep.mubr.f32.mxu0 0.0
          %1122 = vmatmul.mubr.f32.gmra.mrb[0].mxu0 %v1053
          %v1123 = vpop.f32.mrb[0].mxu0
          %v1124 = vadd.f32 0.0, %v1123
          %v1125 = vpop.f32.mrb[0].mxu0
          %1126 = vdwg.mxu0
          %v1127 = vsel %vm541, %v1124, -inf
          %1128 = vmax.xlane.f32.xlu0 %v1127
          %v1129 = vpop.xlane.xlu0 %1128
          %v1130 = vsub.f32 %v1124, %v1129
          %v1131 = vmul.f32 %v1130, 1.442695
          %v1132 = vpow.pop %v1131
          %v1133 = vsel %vm541, %v1132, 0.0
          %1134 = vadd.xlane.f32.xlu0 %v1133
          %v1135 = vpop.xlane.xlu0 %1134
          %1136 = vrot.lane.b32.xlu0 %v535, 40
          %v1137 = vpop.permute.xlu0 %1136
          %v1140 = vsel %vm541, %v1132, 0
          %1142 = vmatprep.subr.mxu0 0.0
          %1143 = vmatpush1.msra.mxu0 %v1137
          %1144 = vmatprep.subr.mxu0 0.0
          %1145 = vmatpush1.msra.mxu0 0.0
          %1146 = vmatprep.subr.mxu0 0.0
          %1147 = vmatpush1.msra.mxu0 0.0
          %1148 = vmatprep.subr.mxu0 0.0
          %1149 = vmatpush1.msra.mxu0 0.0
          %1150 = vmatprep.subr.mxu0 0.0
          %1151 = vmatpush1.msra.mxu0 0.0
          %1152 = vmatprep.subr.mxu0 0.0
          %1153 = vmatpush1.msra.mxu0 0.0
          %1154 = vmatprep.subr.mxu0 0.0
          %1155 = vmatpush1.msra.mxu0 0.0
          %1156 = vmatprep.subr.mxu0 0.0
          %1157 = vmatpush1.msra.mxu0 0.0
          %1158 = vmatprep.subr.mxu0 0.0
          %1159 = vmatpush1.msra.mxu0 0.0
          %1160 = vmatprep.subr.mxu0 0.0
          %1161 = vmatpush1.msra.mxu0 0.0
          %1162 = vmatprep.subr.mxu0 0.0
          %1163 = vmatpush1.msra.mxu0 0.0
          %1164 = vmatprep.subr.mxu0 0.0
          %1165 = vmatpush1.msra.mxu0 0.0
          %1166 = vmatprep.subr.mxu0 0.0
          %1167 = vmatpush1.msra.mxu0 0.0
          %1168 = vmatprep.subr.mxu0 0.0
          %1169 = vmatpush1.msra.mxu0 0.0
          %1170 = vmatprep.subr.mxu0 0.0
          %1171 = vmatpush1.msra.mxu0 0.0
          %1172 = vmatprep.subr.mxu0 0.0
          %1173 = vmatpush1.msra.mxu0 0.0
          %1174 = vmatprep.subr.mxu0 0.0
          %1175 = vmatpush1.msra.mxu0 0.0
          %1176 = vmatprep.subr.mxu0 0.0
          %1177 = vmatpush1.msra.mxu0 0.0
          %1178 = vmatprep.subr.mxu0 0.0
          %1179 = vmatpush1.msra.mxu0 0.0
          %1180 = vmatprep.subr.mxu0 0.0
          %1181 = vmatpush1.msra.mxu0 0.0
          %1182 = vmatprep.subr.mxu0 0.0
          %1183 = vmatpush1.msra.mxu0 0.0
          %1184 = vmatprep.subr.mxu0 0.0
          %1185 = vmatpush1.msra.mxu0 0.0
          %1186 = vmatprep.subr.mxu0 0.0
          %1187 = vmatpush1.msra.mxu0 0.0
          %1188 = vmatprep.subr.mxu0 0.0
          %1189 = vmatpush1.msra.mxu0 0.0
          %1190 = vmatprep.subr.mxu0 0.0
          %1191 = vmatpush1.msra.mxu0 0.0
          %1192 = vmatprep.subr.mxu0 0.0
          %1193 = vmatpush1.msra.mxu0 0.0
          %1194 = vmatprep.subr.mxu0 0.0
          %1195 = vmatpush1.msra.mxu0 0.0
          %1196 = vmatprep.subr.mxu0 0.0
          %1197 = vmatpush1.msra.mxu0 0.0
          %1198 = vmatprep.subr.mxu0 0.0
          %1199 = vmatpush1.msra.mxu0 0.0
          %1200 = vmatprep.subr.mxu0 0.0
          %1201 = vmatpush1.msra.mxu0 0.0
          %1202 = vmatprep.subr.mxu0 0.0
          %1203 = vmatpush1.msra.mxu0 0.0
          %1204 = vmatprep.subr.mxu0 0.0
          %1205 = vmatpush1.msra.mxu0 0.0
          %1206 = vmatprep.mubr.f32.mxu0 0.0
          %1207 = vmatmul.mubr.f32.gmra.mrb[0].mxu0 %v1140
          %v1208 = vpop.f32.mrb[0].mxu0
          %v1209 = vadd.f32 0.0, %v1208
          %v1210 = vpop.f32.mrb[0].mxu0
          %1211 = vdwg.mxu0
          %v1212 = vrcp.pop %v1135
          %v1213 = vmul.f32 1.0, %v1212
          %v1214 = vmul.f32 %v1209, %v1213
          %1216 = vrot.lane.b32.xlu0 %v1214, 24
          %v1217 = vpop.permute.xlu0 %1216
          %vm1219 = vcmask 261312
          %1220 = vst.msk [vmem:[#allocation2] sm:$0xff] %vm1219, %v1217
          %v1221 = vld [vmem:[#allocation2] sm:$0xff]
          %v1222 = vld [vmem:[%s3] sm:$0xff]
          %v1223 = vld [vmem:[%s3 + $0x8] sm:$0xff]
          %v1224 = vld [vmem:[%s3 + $0x10] sm:$0xff]
          %v1225 = vld [vmem:[%s3 + $0x18] sm:$0xff]
          %v1226 = vld [vmem:[%s4] sm:$0x1]
          %v1228 = vlaneseq
          %v1229 = vshrl.u32 %v1228, 7
          %v1230 = vsub.s32 0, %v1229
          %v1231 = vrot.slane %v1226, %v1230
          %v1234 = vsel %vm464, %v1221, 0
          %1236 = vmatprep.subr.mxu0 0.0
          %1237 = vmatpush1.msra.mxu0 %v1222
          %1238 = vmatprep.subr.mxu0 0.0
          %1239 = vmatpush1.msra.mxu0 %v1223
          %1240 = vmatprep.subr.mxu0 0.0
          %1241 = vmatpush1.msra.mxu0 %v1224
          %1242 = vmatprep.subr.mxu0 0.0
          %1243 = vmatpush1.msra.mxu0 %v1225
          %1244 = vmatprep.subr.mxu0 0.0
          %1245 = vmatpush1.msra.mxu0 0.0
          %1246 = vmatprep.subr.mxu0 0.0
          %1247 = vmatpush1.msra.mxu0 0.0
          %1248 = vmatprep.subr.mxu0 0.0
          %1249 = vmatpush1.msra.mxu0 0.0
          %1250 = vmatprep.subr.mxu0 0.0
          %1251 = vmatpush1.msra.mxu0 0.0
          %1252 = vmatprep.subr.mxu0 0.0
          %1253 = vmatpush1.msra.mxu0 0.0
          %1254 = vmatprep.subr.mxu0 0.0
          %1255 = vmatpush1.msra.mxu0 0.0
          %1256 = vmatprep.subr.mxu0 0.0
          %1257 = vmatpush1.msra.mxu0 0.0
          %1258 = vmatprep.subr.mxu0 0.0
          %1259 = vmatpush1.msra.mxu0 0.0
          %1260 = vmatprep.subr.mxu0 0.0
          %1261 = vmatpush1.msra.mxu0 0.0
          %1262 = vmatprep.subr.mxu0 0.0
          %1263 = vmatpush1.msra.mxu0 0.0
          %1264 = vmatprep.subr.mxu0 0.0
          %1265 = vmatpush1.msra.mxu0 0.0
          %1266 = vmatprep.subr.mxu0 0.0
          %1267 = vmatpush1.msra.mxu0 0.0
          %1268 = vmatprep.subr.mxu0 0.0
          %1269 = vmatpush1.msra.mxu0 0.0
          %1270 = vmatprep.subr.mxu0 0.0
          %1271 = vmatpush1.msra.mxu0 0.0
          %1272 = vmatprep.subr.mxu0 0.0
          %1273 = vmatpush1.msra.mxu0 0.0
          %1274 = vmatprep.subr.mxu0 0.0
          %1275 = vmatpush1.msra.mxu0 0.0
          %1276 = vmatprep.subr.mxu0 0.0
          %1277 = vmatpush1.msra.mxu0 0.0
          %1278 = vmatprep.subr.mxu0 0.0
          %1279 = vmatpush1.msra.mxu0 0.0
          %1280 = vmatprep.subr.mxu0 0.0
          %1281 = vmatpush1.msra.mxu0 0.0
          %1282 = vmatprep.subr.mxu0 0.0
          %1283 = vmatpush1.msra.mxu0 0.0
          %1284 = vmatprep.subr.mxu0 0.0
          %1285 = vmatpush1.msra.mxu0 0.0
          %1286 = vmatprep.subr.mxu0 0.0
          %1287 = vmatpush1.msra.mxu0 0.0
          %1288 = vmatprep.subr.mxu0 0.0
          %1289 = vmatpush1.msra.mxu0 0.0
          %1290 = vmatprep.subr.mxu0 0.0
          %1291 = vmatpush1.msra.mxu0 0.0
          %1292 = vmatprep.subr.mxu0 0.0
          %1293 = vmatpush1.msra.mxu0 0.0
          %1294 = vmatprep.subr.mxu0 0.0
          %1295 = vmatpush1.msra.mxu0 0.0
          %1296 = vmatprep.subr.mxu0 0.0
          %1297 = vmatpush1.msra.mxu0 0.0
          %1298 = vmatprep.subr.mxu0 0.0
          %1299 = vmatpush1.msra.mxu0 0.0
          %1300 = vmatprep.mubr.f32.mxu0 0.0
          %1301 = vmatmul.mubr.f32.gmra.mrb[0].mxu0 %v1234
          %v1302 = vpop.f32.mrb[0].mxu0
          %v1303 = vadd.f32 %v1231, %v1302
          %v1304 = vpop.f32.mrb[0].mxu0
          %1305 = vdwg.mxu0
          %v1306 = vadd.f32 %v452, %v1303
          %v1307 = vld [vmem:[%s5] sm:$0x1]
          %v1308 = vld [vmem:[%s6] sm:$0x1]
          %v1309 = vsel %vm464, %v1306, 0.0
          %1310 = vadd.xlane.f32.xlu0 %v1309
          %v1311 = vpop.xlane.xlu0 %1310
          %v1312 = vrcp.pop 32.0
          %v1313 = vmul.f32 %v1311, %v1312
          %v1314 = vsub.f32 %v1306, %v1313
          %v1315 = vmul.f32 %v1314, %v1314
          %v1316 = vsel %vm464, %v1315, 0.0
          %1317 = vadd.xlane.f32.xlu0 %v1316
          %v1318 = vpop.xlane.xlu0 %1317
          %v1319 = vmul.f32 %v1318, %v1312
          %v1320 = vadd.f32 %v1319, 1e-05
          %v1321 = vrsqrt.pop %v1320
          %v1322 = vmul.f32 %v1314, %v1321
          %v1324 = vlaneseq
          %v1325 = vshrl.u32 %v1324, 7
          %v1326 = vsub.s32 0, %v1325
          %v1327 = vrot.slane %v1307, %v1326
          %v1329 = vmul.f32 %v1322, %v1327
          %v1331 = vlaneseq
          %v1332 = vshrl.u32 %v1331, 7
          %v1333 = vsub.s32 0, %v1332
          %v1334 = vrot.slane %v1308, %v1333
          %v1336 = vadd.f32 %v1329, %v1334
          %1337 = vst.msk [vmem:[#allocation2] sm:$0xff] %vm464, %v1336
          %1338 = vst.msk [vmem:[#allocation3] sm:$0xff] %vm464, 0.0
        $region76: #{transformer_block.1} parent=71 // pred_fallthru
          _
        %v1339 = vld [vmem:[#allocation2] sm:$0xff]
        %v1340 = vld [vmem:[%s7] sm:$0xff]
        %v1341 = vld [vmem:[%s7 + $0x8] sm:$0xff]
        %v1342 = vld [vmem:[%s7 + $0x10] sm:$0xff]
        %v1343 = vld [vmem:[%s7 + $0x18] sm:$0xff]
        %v1344 = vld [vmem:[%s8] sm:$0x1]
        %v1346 = vlaneseq
        %v1347 = vshrl.u32 %v1346, 7
        %v1348 = vsub.s32 0, %v1347
        %v1349 = vrot.slane %v1344, %v1348
        %vm1351 = vcmask 261120
        %v1353 = vsel %vm1351, %v1339, 0
        %1355 = vmatprep.subr.mxu0 0.0
        %1356 = vmatpush1.msra.mxu0 %v1340
        %1357 = vmatprep.subr.mxu0 0.0
        %1358 = vmatpush1.msra.mxu0 %v1341
        %1359 = vmatprep.subr.mxu0 0.0
        %1360 = vmatpush1.msra.mxu0 %v1342
        %1361 = vmatprep.subr.mxu0 0.0
        %1362 = vmatpush1.msra.mxu0 %v1343
        %1363 = vmatprep.subr.mxu0 0.0
        %1364 = vmatpush1.msra.mxu0 0.0
        %1365 = vmatprep.subr.mxu0 0.0
        %1366 = vmatpush1.msra.mxu0 0.0
        %1367 = vmatprep.subr.mxu0 0.0
        %1368 = vmatpush1.msra.mxu0 0.0
        %1369 = vmatprep.subr.mxu0 0.0
        %1370 = vmatpush1.msra.mxu0 0.0
        %1371 = vmatprep.subr.mxu0 0.0
        %1372 = vmatpush1.msra.mxu0 0.0
        %1373 = vmatprep.subr.mxu0 0.0
        %1374 = vmatpush1.msra.mxu0 0.0
        %1375 = vmatprep.subr.mxu0 0.0
        %1376 = vmatpush1.msra.mxu0 0.0
        %1377 = vmatprep.subr.mxu0 0.0
        %1378 = vmatpush1.msra.mxu0 0.0
        %1379 = vmatprep.subr.mxu0 0.0
        %1380 = vmatpush1.msra.mxu0 0.0
        %1381 = vmatprep.subr.mxu0 0.0
        %1382 = vmatpush1.msra.mxu0 0.0
        %1383 = vmatprep.subr.mxu0 0.0
        %1384 = vmatpush1.msra.mxu0 0.0
        %1385 = vmatprep.subr.mxu0 0.0
        %1386 = vmatpush1.msra.mxu0 0.0
        %1387 = vmatprep.subr.mxu0 0.0
        %1388 = vmatpush1.msra.mxu0 0.0
        %1389 = vmatprep.subr.mxu0 0.0
        %1390 = vmatpush1.msra.mxu0 0.0
        %1391 = vmatprep.subr.mxu0 0.0
        %1392 = vmatpush1.msra.mxu0 0.0
        %1393 = vmatprep.subr.mxu0 0.0
        %1394 = vmatpush1.msra.mxu0 0.0
        %1395 = vmatprep.subr.mxu0 0.0
        %1396 = vmatpush1.msra.mxu0 0.0
        %1397 = vmatprep.subr.mxu0 0.0
        %1398 = vmatpush1.msra.mxu0 0.0
        %1399 = vmatprep.subr.mxu0 0.0
        %1400 = vmatpush1.msra.mxu0 0.0
        %1401 = vmatprep.subr.mxu0 0.0
        %1402 = vmatpush1.msra.mxu0 0.0
        %1403 = vmatprep.subr.mxu0 0.0
        %1404 = vmatpush1.msra.mxu0 0.0
        %1405 = vmatprep.subr.mxu0 0.0
        %1406 = vmatpush1.msra.mxu0 0.0
        %1407 = vmatprep.subr.mxu0 0.0
        %1408 = vmatpush1.msra.mxu0 0.0
        %1409 = vmatprep.subr.mxu0 0.0
        %1410 = vmatpush1.msra.mxu0 0.0
        %1411 = vmatprep.subr.mxu0 0.0
        %1412 = vmatpush1.msra.mxu0 0.0
        %1413 = vmatprep.subr.mxu0 0.0
        %1414 = vmatpush1.msra.mxu0 0.0
        %1415 = vmatprep.subr.mxu0 0.0
        %1416 = vmatpush1.msra.mxu0 0.0
        %1417 = vmatprep.subr.mxu0 0.0
        %1418 = vmatpush1.msra.mxu0 0.0
        %1419 = vmatprep.mubr.f32.mxu0 0.0
        %1420 = vmatmul.mubr.f32.gmra.mrb[0].mxu0 %v1353
        %v1421 = vpop.f32.mrb[0].mxu0
        %v1422 = vadd.f32 %v1349, %v1421
        %v1423 = vpop.f32.mrb[0].mxu0
        %1424 = vdwg.mxu0
        %v1425 = vmul.f32 %v1422, 0.5
        %v1426 = vmul.f32 %v1422, 0.70710677
        %v1427 = verf.f32.pop %v1426
        %v1428 = vadd.f32 %v1427, 1.0
        %v1429 = vmul.f32 %v1425, %v1428
        %v1430 = vld [vmem:[#allocation3] sm:$0xff]
        %v1431 = vld [vmem:[%s9] sm:$0xff]
        %v1432 = vld [vmem:[%s9 + $0x8] sm:$0xff]
        %v1433 = vld [vmem:[%s9 + $0x10] sm:$0xff]
        %v1434 = vld [vmem:[%s9 + $0x18] sm:$0xff]
        %v1435 = vld [vmem:[%s9 + $0x20] sm:$0xff]
        %v1436 = vld [vmem:[%s9 + $0x28] sm:$0xff]
        %v1437 = vld [vmem:[%s9 + $0x30] sm:$0xff]
        %v1438 = vld [vmem:[%s9 + $0x38] sm:$0xff]
        %vm1439 = vcmask 523264
        %v1441 = vsel %vm1439, %v1429, 0
        %1443 = vmatprep.subr.mxu0 0.0
        %1444 = vmatpush1.msra.mxu0 %v1431
        %1445 = vmatprep.subr.mxu0 0.0
        %1446 = vmatpush1.msra.mxu0 %v1432
        %1447 = vmatprep.subr.mxu0 0.0
        %1448 = vmatpush1.msra.mxu0 %v1433
        %1449 = vmatprep.subr.mxu0 0.0
        %1450 = vmatpush1.msra.mxu0 %v1434
        %1451 = vmatprep.subr.mxu0 0.0
        %1452 = vmatpush1.msra.mxu0 %v1435
        %1453 = vmatprep.subr.mxu0 0.0
        %1454 = vmatpush1.msra.mxu0 %v1436
        %1455 = vmatprep.subr.mxu0 0.0
        %1456 = vmatpush1.msra.mxu0 %v1437
        %1457 = vmatprep.subr.mxu0 0.0
        %1458 = vmatpush1.msra.mxu0 %v1438
        %1459 = vmatprep.subr.mxu0 0.0
        %1460 = vmatpush1.msra.mxu0 0.0
        %1461 = vmatprep.subr.mxu0 0.0
        %1462 = vmatpush1.msra.mxu0 0.0
        %1463 = vmatprep.subr.mxu0 0.0
        %1464 = vmatpush1.msra.mxu0 0.0
        %1465 = vmatprep.subr.mxu0 0.0
        %1466 = vmatpush1.msra.mxu0 0.0
        %1467 = vmatprep.subr.mxu0 0.0
        %1468 = vmatpush1.msra.mxu0 0.0
        %1469 = vmatprep.subr.mxu0 0.0
        %1470 = vmatpush1.msra.mxu0 0.0
        %1471 = vmatprep.subr.mxu0 0.0
        %1472 = vmatpush1.msra.mxu0 0.0
        %1473 = vmatprep.subr.mxu0 0.0
        %1474 = vmatpush1.msra.mxu0 0.0
        %1475 = vmatprep.subr.mxu0 0.0
        %1476 = vmatpush1.msra.mxu0 0.0
        %1477 = vmatprep.subr.mxu0 0.0
        %1478 = vmatpush1.msra.mxu0 0.0
        %1479 = vmatprep.subr.mxu0 0.0
        %1480 = vmatpush1.msra.mxu0 0.0
        %1481 = vmatprep.subr.mxu0 0.0
        %1482 = vmatpush1.msra.mxu0 0.0
        %1483 = vmatprep.subr.mxu0 0.0
        %1484 = vmatpush1.msra.mxu0 0.0
        %1485 = vmatprep.subr.mxu0 0.0
        %1486 = vmatpush1.msra.mxu0 0.0
        %1487 = vmatprep.subr.mxu0 0.0
        %1488 = vmatpush1.msra.mxu0 0.0
        %1489 = vmatprep.subr.mxu0 0.0
        %1490 = vmatpush1.msra.mxu0 0.0
        %1491 = vmatprep.subr.mxu0 0.0
        %1492 = vmatpush1.msra.mxu0 0.0
        %1493 = vmatprep.subr.mxu0 0.0
        %1494 = vmatpush1.msra.mxu0 0.0
        %1495 = vmatprep.subr.mxu0 0.0
        %1496 = vmatpush1.msra.mxu0 0.0
        %1497 = vmatprep.subr.mxu0 0.0
        %1498 = vmatpush1.msra.mxu0 0.0
        %1499 = vmatprep.subr.mxu0 0.0
        %1500 = vmatpush1.msra.mxu0 0.0
        %1501 = vmatprep.subr.mxu0 0.0
        %1502 = vmatpush1.msra.mxu0 0.0
        %1503 = vmatprep.subr.mxu0 0.0
        %1504 = vmatpush1.msra.mxu0 0.0
        %1505 = vmatprep.subr.mxu0 0.0
        %1506 = vmatpush1.msra.mxu0 0.0
        %1507 = vmatprep.mubr.f32.mxu0 0.0
        %1508 = vmatmul.mubr.f32.gmra.mrb[0].mxu0 %v1441
        %v1509 = vpop.f32.mrb[0].mxu0
        %v1510 = vadd.f32 0.0, %v1509
        %v1511 = vpop.f32.mrb[0].mxu0
        %1512 = vdwg.mxu0
        %v1513 = vadd.f32 %v1430, %v1510
        %1514 = vst.msk [vmem:[#allocation3] sm:$0xff] %vm1351, %v1513
        // Predicated region
        $region77: #{transformer_block.1} parent=71 // pred_check
          %p1515 = pneg %p448
        $region78: #{transformer_block.1} parent=71 // pred_check_branch
          %1517 = sbr.rel (%p1515) target = $region80
        $region79: #{transformer_block.1} parent=71 // pred_region
          %v1518 = vld [vmem:[#allocation3] sm:$0xff]
          %v1519 = vld [vmem:[%s10] sm:$0x1]
          %v1521 = vlaneseq
          %v1522 = vshrl.u32 %v1521, 7
          %v1523 = vsub.s32 0, %v1522
          %v1524 = vrot.slane %v1519, %v1523
          %v1526 = vadd.f32 %v1518, %v1524
          %v1527 = vld [vmem:[#allocation2] sm:$0xff]
          %v1528 = vadd.f32 %v1527, %v1526
          %v1529 = vld [vmem:[%s11] sm:$0x1]
          %v1530 = vld [vmem:[%s12] sm:$0x1]
          %v1531 = vsel %vm1351, %v1528, 0.0
          %1532 = vadd.xlane.f32.xlu0 %v1531
          %v1533 = vpop.xlane.xlu0 %1532
          %v1534 = vrcp.pop 32.0
          %v1535 = vmul.f32 %v1533, %v1534
          %v1536 = vsub.f32 %v1528, %v1535
          %v1537 = vmul.f32 %v1536, %v1536
          %v1538 = vsel %vm1351, %v1537, 0.0
          %1539 = vadd.xlane.f32.xlu0 %v1538
          %v1540 = vpop.xlane.xlu0 %1539
          %v1541 = vmul.f32 %v1540, %v1534
          %v1542 = vadd.f32 %v1541, 1e-05
          %v1543 = vrsqrt.pop %v1542
          %v1544 = vmul.f32 %v1536, %v1543
          %v1546 = vlaneseq
          %v1547 = vshrl.u32 %v1546, 7
          %v1548 = vsub.s32 0, %v1547
          %v1549 = vrot.slane %v1529, %v1548
          %v1551 = vmul.f32 %v1544, %v1549
          %v1553 = vlaneseq
          %v1554 = vshrl.u32 %v1553, 7
          %v1555 = vsub.s32 0, %v1554
          %v1556 = vrot.slane %v1530, %v1555
          %v1558 = vadd.f32 %v1551, %v1556
          %1559 = vst.msk [vmem:[%s443] sm:$0xff] %vm1351, %v1558
        $region80: #{transformer_block.1} parent=71 // pred_fallthru
          _
        %s1560 = sand.u32 %s325, 1
        %s1561 = scalar_lea.sflag [#allocation5], %s1560
        %s1562 = sand.u32 %s325, 1
        %s1563 = smul.addr %s1562, 8
        %s1564 = scalar_lea.vmem [#allocation4], %s1563
        // Predicated region
        $region81: #{transformer_block.1} parent=71 // pred_check
          %p1565 = pneg %p335
        $region82: #{transformer_block.1} parent=71 // pred_check_branch
          %1567 = sbr.rel (%p1565) target = $region84
        $region83: #{transformer_block.1} parent=71 // pred_region
          %s1569 = ssub.s32 128, 128
          %1570 = vsyncadd %s1561, %s1569
          %s1571 = smul.addr %s31, 128
          %s1572 = scalar_lea.hbm %s13, %s1571
          %s1574 = sshll.u32 %s1564, 4
          %s1575 = int_to_ptr.vmem [resolvable:$true] %s1574
          %1577 = dma.vmem_to_hbm [thread:$0]  %s1575, 128, %s1572, %s1561
        $region84: #{transformer_block.1} parent=71 // pred_fallthru
          _
      $region72: #{transformer_block.1} parent=5 // pred_fallthru
        _
      %p1578 = scmp.le.s32.totalorder 2, %s22
      // Predicated region
      $region85: #{transformer_block.1} parent=5 // pred_check
        %p1579 = pneg %p1578
      $region86: #{transformer_block.1} parent=5 // pred_check_branch
        %1581 = sbr.rel (%p1579) target = $region88
      $region87: #{transformer_block.1} parent=5 // pred_region
        %s1582 = ssub.s32 %s22, 2
        // Predicated region
        $region89: #{transformer_block.1} parent=87 // pred_check
          %p1583 = pneg %p341
        $region90: #{transformer_block.1} parent=87 // pred_check_branch
          %1585 = sbr.rel (%p1583) target = $region92
        $region91: #{transformer_block.1} parent=87 // pred_region
          %s1586 = sand.u32 %s326, 1
          %s1587 = scalar_lea.sflag [#allocation5], %s1586
          %s1588 = sand.u32 %s326, 1
          %s1589 = smul.addr %s1588, 8
          %s1590 = scalar_lea.vmem [#allocation4], %s1589
          %1591 = dma.done %s1587, 128
        $region92: #{transformer_block.1} parent=87 // pred_fallthru
          _
      $region88: #{transformer_block.1} parent=5 // pred_fallthru
        _
    $region6: #{transformer_block.1} parent=1 // loop_footer
      %s26 = sadd.s32 1, %s22
    $region7: #{transformer_block.1} parent=1 // loop_footer_branch
      %21 = sbr.rel target = $region3
    $region8: #{transformer_block.1} parent=1 // loop_exit
      _
    %1592 = vsyncpa [#allocation5], 1
    %s1593 = scalar_lea.sflag [#allocation5], 1
    %1594 = vsyncpa %s1593, 1

</llo_original>
